<compile_context>
chip_gen: v6e
topology: v6e:2x2x1
jax: 0.10.0
libtpu: 0.0.40
codegen_flags: <defaults>
</compile_context>

<pallas_src>
import jax
import jax.numpy as jnp
from jax.experimental import pallas as pl
from jax.experimental.pallas import tpu as pltpu

LATENT_DIM = 9
_BATCH_ALIGN = 16         # sublane granularity safe for both bf16 and f32 tiles
_BOTTLENECK_PAD = 128     # latent dim padded to 128 lanes *inside* the kernel only


def _round_up(x, m):
    return ((x + m - 1) // m) * m


def _cdiv(a, b):
    return (a + b - 1) // b


def _num_tensorcores():
    """2 for dual-TensorCore chips (v7x); 1 otherwise. Best-effort probe."""
    try:
        kind = jax.devices()[0].device_kind.lower()
    except Exception:
        return 1
    return 2 if "v7" in kind else 1


def _kernel_dims(input_dim):
    """(in, out) dims as the kernel sees them (bottleneck zero-padded to 128)."""
    return [(input_dim, 256), (256, 128), (128, 64), (64, _BOTTLENECK_PAD),
            (_BOTTLENECK_PAD, 64), (64, 128), (128, 256), (256, input_dim)]


def _autoencoder_kernel(x_ref,
                        w1, b1, w2, b2, w3, b3, w4, b4,
                        w5, b5, w6, b6, w7, b7, w8, b8,
                        recon_ref, latent_ref):
    def dense(h_bf16, w_ref, b_ref):
        # bf16 x bf16 -> f32 accumulate on the MXU; bias add in f32 on the VPU.
        return jnp.dot(h_bf16, w_ref[...],
                       preferred_element_type=jnp.float32) + b_ref[...]

    def dense_relu(h_bf16, w_ref, b_ref):
        # Carry inter-layer activations in bf16: next matmul needs bf16 anyway,
        # and it halves vreg pressure / VMEM spill traffic between layers.
        return jnp.maximum(dense(h_bf16, w_ref, b_ref), 0.0).astype(jnp.bfloat16)

    h = x_ref[...].astype(jnp.bfloat16)          # f32 -> bf16 cast done in-kernel
    # encoder: D -> 256 -> 128 -> 64 -> 128 (latent zero-padded to 128 lanes)
    h = dense_relu(h, w1, b1)
    h = dense_relu(h, w2, b2)
    h = dense_relu(h, w3, b3)
    latent = dense(h, w4, b4)                    # f32 (tile, 128); cols >= 9 are 0
    # only the real LATENT_DIM columns hit HBM (14x smaller writeback)
    latent_ref[...] = latent[:, :LATENT_DIM]
    # decoder: 128 -> 64 -> 128 -> 256 -> D
    h = dense_relu(latent.astype(jnp.bfloat16), w5, b5)
    h = dense_relu(h, w6, b6)
    h = dense_relu(h, w7, b7)
    recon_ref[...] = dense(h, w8, b8)            # f32 (tile, D), lane width == D


def init_params(key, input_dim, latent_dim=LATENT_DIM):
    """torch.nn.Linear default init (U(+-1/sqrt(fan_in))); weights stored (in, out)."""
    dims = [(input_dim, 256), (256, 128), (128, 64), (64, latent_dim),
            (latent_dim, 64), (64, 128), (128, 256), (256, input_dim)]
    params = []
    for fan_in, fan_out in dims:
        key, kw, kb = jax.random.split(key, 3)
        bound = 1.0 / (fan_in ** 0.5)
        w = jax.random.uniform(kw, (fan_in, fan_out), jnp.float32, -bound, bound)
        b = jax.random.uniform(kb, (1, fan_out), jnp.float32, -bound, bound)
        params.append((w, b))
    return params


def _prepare_params(params):
    """Weights -> bf16, biases stay f32; zero-pad only the 9-wide bottleneck."""
    prepped = []
    for idx, (w, b) in enumerate(params):
        pi, po = w.shape
        if idx == 3:                 # encoder output layer: pad out-dim 9 -> 128
            po = _BOTTLENECK_PAD
        if idx == 4:                 # decoder input layer: pad in-dim 9 -> 128
            pi = _BOTTLENECK_PAD
        if (pi, po) == w.shape:
            w_p = w.astype(jnp.bfloat16)
            b_p = b.astype(jnp.float32)
        else:
            w_p = jnp.zeros((pi, po), jnp.bfloat16)
            w_p = w_p.at[:w.shape[0], :w.shape[1]].set(w.astype(jnp.bfloat16))
            b_p = jnp.zeros((1, po), jnp.float32).at[:, :b.shape[1]].set(b)
        prepped.append((w_p, b_p))
    return prepped


def weather_autoencoder_forward(x, params, *, batch_tile=2048):
    B, D = x.shape

    # ---- batch tile selection ------------------------------------------------
    b_al = _round_up(B, _BATCH_ALIGN)
    tile = min(_round_up(batch_tile, _BATCH_ALIGN), b_al)
    n_cores = _num_tensorcores()
    steps = _cdiv(b_al, tile)
    if n_cores > 1 and steps > 1 and steps % n_cores != 0:
        # v7x only: rebalance the tile so the "parallel" grid splits evenly
        # across both TensorCores instead of leaving one idle on the last step.
        steps = _round_up(steps, n_cores)
        tile = _round_up(_cdiv(b_al, steps), _BATCH_ALIGN)
    b_pad = _round_up(b_al, tile)
    grid = (b_pad // tile,)

    # ---- pad the batch only when strictly needed (no feature padding at all) -
    x_in = x if b_pad == B else jnp.zeros((b_pad, D), x.dtype).at[:B].set(x)
    prepped = _prepare_params(params)

    def const_spec(shape):
        # full-array block + constant index -> DMA'd once, stays VMEM-resident
        return pl.BlockSpec(shape, lambda i: (0, 0))

    in_specs = [pl.BlockSpec((tile, D), lambda i: (i, 0))]
    flat_args = [x_in]
    for w_p, b_p in prepped:
        in_specs += [const_spec(w_p.shape), const_spec(b_p.shape)]
        flat_args += [w_p, b_p]

    out_specs = (pl.BlockSpec((tile, D), lambda i: (i, 0)),
                 pl.BlockSpec((tile, LATENT_DIM), lambda i: (i, 0)))
    out_shape = (jax.ShapeDtypeStruct((b_pad, D), jnp.float32),
                 jax.ShapeDtypeStruct((b_pad, LATENT_DIM), jnp.float32))

    kdims = _kernel_dims(D)
    flops = 2 * b_pad * sum(i * o for i, o in kdims)
    bytes_accessed = (b_pad * D * 4                        # x (f32 in)
                      + b_pad * D * 4                      # recon (f32 out)
                      + b_pad * LATENT_DIM * 4             # latent (f32 out)
                      + sum(i * o * 2 + o * 4 for i, o in kdims))
    cost = pl.CostEstimate(flops=flops, transcendentals=0,
                           bytes_accessed=bytes_accessed)

    recon_p, latent_p = pl.pallas_call(
        _autoencoder_kernel,
        grid=grid,
        in_specs=in_specs,
        out_specs=out_specs,
        out_shape=out_shape,
        compiler_params=pltpu.CompilerParams(
            dimension_semantics=("parallel",),
            vmem_limit_bytes=32 * 1024 * 1024),
        cost_estimate=cost,
    )(*flat_args)

    if b_pad == B:
        return recon_p, latent_p
    return recon_p[:B], latent_p[:B]


def _reference_forward(x, params, matmul_dtype=jnp.float32):
    """Pure-JAX reference. matmul_dtype=bf16 mirrors the kernel's MXU numerics."""
    def dense(h, w, b, relu):
        y = jnp.dot(h.astype(matmul_dtype), w.astype(matmul_dtype),
                    preferred_element_type=jnp.float32) + b
        return jnp.maximum(y, 0.0) if relu else y

    h = x
    for i in range(3):
        h = dense(h, *params[i], True)
    latent = dense(h, *params[3], False)
    h = latent
    for i in range(4, 7):
        h = dense(h, *params[i], True)
    recon = dense(h, *params[7], False)
    return recon, latent


if __name__ == "__main__":
    key = jax.random.PRNGKey(0)
    k_x, k_p = jax.random.split(key)

    batch, input_dim = 256, 32
    x = jax.random.normal(k_x, (batch, input_dim), jnp.float32)
    params = init_params(k_p, input_dim, LATENT_DIM)

    recon, latent = weather_autoencoder_forward(x, params)
    jax.block_until_ready((recon, latent))

    assert recon.shape == (batch, input_dim)
    assert latent.shape == (batch, LATENT_DIM)

    # tight check vs. a reference mirroring the kernel's bf16-matmul / f32-accumulate
    recon_bf, latent_bf = _reference_forward(x, params, jnp.bfloat16)
    assert jnp.allclose(recon, recon_bf, atol=5e-3, rtol=5e-3)
    assert jnp.allclose(latent, latent_bf, atol=5e-3, rtol=5e-3)

    # loose check vs. the full-f32 torch semantics (bf16 matmul error budget)
    recon_f32, latent_f32 = _reference_forward(x, params, jnp.float32)
    assert jnp.allclose(recon, recon_f32, atol=1e-1, rtol=1e-1)
    assert jnp.allclose(latent, latent_f32, atol=1e-1, rtol=1e-1)

    print("KERNEL_OK")
</pallas_src>

<mosaic_0001>
module attributes {stable_mosaic.version = 11 : i64} {
  func.func @_autoencoder_kernel(%arg0: i32, %arg1: memref<256x32xf32, #tpu.memory_space<vmem>>, %arg2: memref<32x256xbf16, #tpu.memory_space<vmem>>, %arg3: memref<1x256xf32, #tpu.memory_space<vmem>>, %arg4: memref<256x128xbf16, #tpu.memory_space<vmem>>, %arg5: memref<1x128xf32, #tpu.memory_space<vmem>>, %arg6: memref<128x64xbf16, #tpu.memory_space<vmem>>, %arg7: memref<1x64xf32, #tpu.memory_space<vmem>>, %arg8: memref<64x128xbf16, #tpu.memory_space<vmem>>, %arg9: memref<1x128xf32, #tpu.memory_space<vmem>>, %arg10: memref<128x64xbf16, #tpu.memory_space<vmem>>, %arg11: memref<1x64xf32, #tpu.memory_space<vmem>>, %arg12: memref<64x128xbf16, #tpu.memory_space<vmem>>, %arg13: memref<1x128xf32, #tpu.memory_space<vmem>>, %arg14: memref<128x256xbf16, #tpu.memory_space<vmem>>, %arg15: memref<1x256xf32, #tpu.memory_space<vmem>>, %arg16: memref<256x32xbf16, #tpu.memory_space<vmem>>, %arg17: memref<1x32xf32, #tpu.memory_space<vmem>>, %arg18: memref<256x32xf32, #tpu.memory_space<vmem>>, %arg19: memref<256x9xf32, #tpu.memory_space<vmem>>) attributes {dimension_semantics = [#tpu.dimension_semantics<parallel>], iteration_bounds = array<i64: 1>, scalar_prefetch = 0 : i64, scratch_operands = 0 : i64, tpu.core_type = #tpu.core_type<tc>, window_params = [{transform_indices = @transform_0, window_bounds = array<i64: 256, 32>}, {pipeline_mode = #tpu.pipeline_mode<synchronous>, transform_indices = @transform_1, window_bounds = array<i64: 32, 256>}, {pipeline_mode = #tpu.pipeline_mode<synchronous>, transform_indices = @transform_2, window_bounds = array<i64: 1, 256>}, {pipeline_mode = #tpu.pipeline_mode<synchronous>, transform_indices = @transform_3, window_bounds = array<i64: 256, 128>}, {pipeline_mode = #tpu.pipeline_mode<synchronous>, transform_indices = @transform_4, window_bounds = array<i64: 1, 128>}, {pipeline_mode = #tpu.pipeline_mode<synchronous>, transform_indices = @transform_5, window_bounds = array<i64: 128, 64>}, {pipeline_mode = #tpu.pipeline_mode<synchronous>, transform_indices = @transform_6, window_bounds = array<i64: 1, 64>}, {pipeline_mode = #tpu.pipeline_mode<synchronous>, transform_indices = @transform_7, window_bounds = array<i64: 64, 128>}, {pipeline_mode = #tpu.pipeline_mode<synchronous>, transform_indices = @transform_8, window_bounds = array<i64: 1, 128>}, {pipeline_mode = #tpu.pipeline_mode<synchronous>, transform_indices = @transform_9, window_bounds = array<i64: 128, 64>}, {pipeline_mode = #tpu.pipeline_mode<synchronous>, transform_indices = @transform_10, window_bounds = array<i64: 1, 64>}, {pipeline_mode = #tpu.pipeline_mode<synchronous>, transform_indices = @transform_11, window_bounds = array<i64: 64, 128>}, {pipeline_mode = #tpu.pipeline_mode<synchronous>, transform_indices = @transform_12, window_bounds = array<i64: 1, 128>}, {pipeline_mode = #tpu.pipeline_mode<synchronous>, transform_indices = @transform_13, window_bounds = array<i64: 128, 256>}, {pipeline_mode = #tpu.pipeline_mode<synchronous>, transform_indices = @transform_14, window_bounds = array<i64: 1, 256>}, {pipeline_mode = #tpu.pipeline_mode<synchronous>, transform_indices = @transform_15, window_bounds = array<i64: 256, 32>}, {pipeline_mode = #tpu.pipeline_mode<synchronous>, transform_indices = @transform_16, window_bounds = array<i64: 1, 32>}, {transform_indices = @transform_17, window_bounds = array<i64: 256, 32>}, {transform_indices = @transform_18, window_bounds = array<i64: 256, 9>}]} {
    %c0 = arith.constant 0 : index
    %c0_0 = arith.constant 0 : index
    %0 = vector.load %arg1[%c0, %c0_0] : memref<256x32xf32, #tpu.memory_space<vmem>>, vector<256x32xf32>
    %1 = arith.truncf %0 : vector<256x32xf32> to vector<256x32xbf16>
    %c0_1 = arith.constant 0 : index
    %c0_2 = arith.constant 0 : index
    %2 = vector.load %arg2[%c0_1, %c0_2] : memref<32x256xbf16, #tpu.memory_space<vmem>>, vector<32x256xbf16>
    %cst = arith.constant dense<0.000000e+00> : vector<256x256xf32>
    %3 = tpu.matmul %1, %2, %cst {dimension_numbers = #tpu.dot_dimension_numbers<[1], [0], [0], [1], [0, 0, 1, 1], [], []>} : vector<256x32xbf16>, vector<32x256xbf16>, vector<256x256xf32> -> vector<256x256xf32>
    %c0_3 = arith.constant 0 : index
    %c0_4 = arith.constant 0 : index
    %4 = vector.load %arg3[%c0_3, %c0_4] : memref<1x256xf32, #tpu.memory_space<vmem>>, vector<1x256xf32>
    %5 = vector.broadcast %4 : vector<1x256xf32> to vector<256x256xf32>
    %6 = arith.addf %3, %5 : vector<256x256xf32>
    %cst_5 = arith.constant 0.000000e+00 : f32
    %7 = vector.broadcast %cst_5 : f32 to vector<256x256xf32>
    %8 = arith.maximumf %6, %7 : vector<256x256xf32>
    %9 = arith.truncf %8 : vector<256x256xf32> to vector<256x256xbf16>
    %c0_6 = arith.constant 0 : index
    %c0_7 = arith.constant 0 : index
    %10 = vector.load %arg4[%c0_6, %c0_7] : memref<256x128xbf16, #tpu.memory_space<vmem>>, vector<256x128xbf16>
    %cst_8 = arith.constant dense<0.000000e+00> : vector<256x128xf32>
    %11 = tpu.matmul %9, %10, %cst_8 {dimension_numbers = #tpu.dot_dimension_numbers<[1], [0], [0], [1], [0, 0, 1, 1], [], []>} : vector<256x256xbf16>, vector<256x128xbf16>, vector<256x128xf32> -> vector<256x128xf32>
    %c0_9 = arith.constant 0 : index
    %c0_10 = arith.constant 0 : index
    %12 = vector.load %arg5[%c0_9, %c0_10] : memref<1x128xf32, #tpu.memory_space<vmem>>, vector<1x128xf32>
    %13 = vector.broadcast %12 : vector<1x128xf32> to vector<256x128xf32>
    %14 = arith.addf %11, %13 : vector<256x128xf32>
    %cst_11 = arith.constant 0.000000e+00 : f32
    %15 = vector.broadcast %cst_11 : f32 to vector<256x128xf32>
    %16 = arith.maximumf %14, %15 : vector<256x128xf32>
    %17 = arith.truncf %16 : vector<256x128xf32> to vector<256x128xbf16>
    %c0_12 = arith.constant 0 : index
    %c0_13 = arith.constant 0 : index
    %18 = vector.load %arg6[%c0_12, %c0_13] : memref<128x64xbf16, #tpu.memory_space<vmem>>, vector<128x64xbf16>
    %cst_14 = arith.constant dense<0.000000e+00> : vector<256x64xf32>
    %19 = tpu.matmul %17, %18, %cst_14 {dimension_numbers = #tpu.dot_dimension_numbers<[1], [0], [0], [1], [0, 0, 1, 1], [], []>} : vector<256x128xbf16>, vector<128x64xbf16>, vector<256x64xf32> -> vector<256x64xf32>
    %c0_15 = arith.constant 0 : index
    %c0_16 = arith.constant 0 : index
    %20 = vector.load %arg7[%c0_15, %c0_16] : memref<1x64xf32, #tpu.memory_space<vmem>>, vector<1x64xf32>
    %21 = vector.broadcast %20 : vector<1x64xf32> to vector<256x64xf32>
    %22 = arith.addf %19, %21 : vector<256x64xf32>
    %cst_17 = arith.constant 0.000000e+00 : f32
    %23 = vector.broadcast %cst_17 : f32 to vector<256x64xf32>
    %24 = arith.maximumf %22, %23 : vector<256x64xf32>
    %25 = arith.truncf %24 : vector<256x64xf32> to vector<256x64xbf16>
    %c0_18 = arith.constant 0 : index
    %c0_19 = arith.constant 0 : index
    %26 = vector.load %arg8[%c0_18, %c0_19] : memref<64x128xbf16, #tpu.memory_space<vmem>>, vector<64x128xbf16>
    %cst_20 = arith.constant dense<0.000000e+00> : vector<256x128xf32>
    %27 = tpu.matmul %25, %26, %cst_20 {dimension_numbers = #tpu.dot_dimension_numbers<[1], [0], [0], [1], [0, 0, 1, 1], [], []>} : vector<256x64xbf16>, vector<64x128xbf16>, vector<256x128xf32> -> vector<256x128xf32>
    %c0_21 = arith.constant 0 : index
    %c0_22 = arith.constant 0 : index
    %28 = vector.load %arg9[%c0_21, %c0_22] : memref<1x128xf32, #tpu.memory_space<vmem>>, vector<1x128xf32>
    %29 = vector.broadcast %28 : vector<1x128xf32> to vector<256x128xf32>
    %30 = arith.addf %27, %29 : vector<256x128xf32>
    %31 = vector.extract_strided_slice %30 {offsets = [0, 0], sizes = [256, 9], strides = [1, 1]} : vector<256x128xf32> to vector<256x9xf32>
    %c0_23 = arith.constant 0 : index
    %c0_24 = arith.constant 0 : index
    %32 = vector.load %arg19[%c0_23, %c0_24] : memref<256x9xf32, #tpu.memory_space<vmem>>, vector<256x9xf32>
    tpu.vector_store %arg19[%c0_23, %c0_24], %31 {strides = array<i32>} : memref<256x9xf32, #tpu.memory_space<vmem>>, vector<256x9xf32>,
    %33 = arith.truncf %30 : vector<256x128xf32> to vector<256x128xbf16>
    %c0_25 = arith.constant 0 : index
    %c0_26 = arith.constant 0 : index
    %34 = vector.load %arg10[%c0_25, %c0_26] : memref<128x64xbf16, #tpu.memory_space<vmem>>, vector<128x64xbf16>
    %cst_27 = arith.constant dense<0.000000e+00> : vector<256x64xf32>
    %35 = tpu.matmul %33, %34, %cst_27 {dimension_numbers = #tpu.dot_dimension_numbers<[1], [0], [0], [1], [0, 0, 1, 1], [], []>} : vector<256x128xbf16>, vector<128x64xbf16>, vector<256x64xf32> -> vector<256x64xf32>
    %c0_28 = arith.constant 0 : index
    %c0_29 = arith.constant 0 : index
    %36 = vector.load %arg11[%c0_28, %c0_29] : memref<1x64xf32, #tpu.memory_space<vmem>>, vector<1x64xf32>
    %37 = vector.broadcast %36 : vector<1x64xf32> to vector<256x64xf32>
    %38 = arith.addf %35, %37 : vector<256x64xf32>
    %cst_30 = arith.constant 0.000000e+00 : f32
    %39 = vector.broadcast %cst_30 : f32 to vector<256x64xf32>
    %40 = arith.maximumf %38, %39 : vector<256x64xf32>
    %41 = arith.truncf %40 : vector<256x64xf32> to vector<256x64xbf16>
    %c0_31 = arith.constant 0 : index
    %c0_32 = arith.constant 0 : index
    %42 = vector.load %arg12[%c0_31, %c0_32] : memref<64x128xbf16, #tpu.memory_space<vmem>>, vector<64x128xbf16>
    %cst_33 = arith.constant dense<0.000000e+00> : vector<256x128xf32>
    %43 = tpu.matmul %41, %42, %cst_33 {dimension_numbers = #tpu.dot_dimension_numbers<[1], [0], [0], [1], [0, 0, 1, 1], [], []>} : vector<256x64xbf16>, vector<64x128xbf16>, vector<256x128xf32> -> vector<256x128xf32>
    %c0_34 = arith.constant 0 : index
    %c0_35 = arith.constant 0 : index
    %44 = vector.load %arg13[%c0_34, %c0_35] : memref<1x128xf32, #tpu.memory_space<vmem>>, vector<1x128xf32>
    %45 = vector.broadcast %44 : vector<1x128xf32> to vector<256x128xf32>
    %46 = arith.addf %43, %45 : vector<256x128xf32>
    %cst_36 = arith.constant 0.000000e+00 : f32
    %47 = vector.broadcast %cst_36 : f32 to vector<256x128xf32>
    %48 = arith.maximumf %46, %47 : vector<256x128xf32>
    %49 = arith.truncf %48 : vector<256x128xf32> to vector<256x128xbf16>
    %c0_37 = arith.constant 0 : index
    %c0_38 = arith.constant 0 : index
    %50 = vector.load %arg14[%c0_37, %c0_38] : memref<128x256xbf16, #tpu.memory_space<vmem>>, vector<128x256xbf16>
    %cst_39 = arith.constant dense<0.000000e+00> : vector<256x256xf32>
    %51 = tpu.matmul %49, %50, %cst_39 {dimension_numbers = #tpu.dot_dimension_numbers<[1], [0], [0], [1], [0, 0, 1, 1], [], []>} : vector<256x128xbf16>, vector<128x256xbf16>, vector<256x256xf32> -> vector<256x256xf32>
    %c0_40 = arith.constant 0 : index
    %c0_41 = arith.constant 0 : index
    %52 = vector.load %arg15[%c0_40, %c0_41] : memref<1x256xf32, #tpu.memory_space<vmem>>, vector<1x256xf32>
    %53 = vector.broadcast %52 : vector<1x256xf32> to vector<256x256xf32>
    %54 = arith.addf %51, %53 : vector<256x256xf32>
    %cst_42 = arith.constant 0.000000e+00 : f32
    %55 = vector.broadcast %cst_42 : f32 to vector<256x256xf32>
    %56 = arith.maximumf %54, %55 : vector<256x256xf32>
    %57 = arith.truncf %56 : vector<256x256xf32> to vector<256x256xbf16>
    %c0_43 = arith.constant 0 : index
    %c0_44 = arith.constant 0 : index
    %58 = vector.load %arg16[%c0_43, %c0_44] : memref<256x32xbf16, #tpu.memory_space<vmem>>, vector<256x32xbf16>
    %cst_45 = arith.constant dense<0.000000e+00> : vector<256x32xf32>
    %59 = tpu.matmul %57, %58, %cst_45 {dimension_numbers = #tpu.dot_dimension_numbers<[1], [0], [0], [1], [0, 0, 1, 1], [], []>} : vector<256x256xbf16>, vector<256x32xbf16>, vector<256x32xf32> -> vector<256x32xf32>
    %c0_46 = arith.constant 0 : index
    %c0_47 = arith.constant 0 : index
    %60 = vector.load %arg17[%c0_46, %c0_47] : memref<1x32xf32, #tpu.memory_space<vmem>>, vector<1x32xf32>
    %61 = vector.broadcast %60 : vector<1x32xf32> to vector<256x32xf32>
    %62 = arith.addf %59, %61 : vector<256x32xf32>
    %c0_48 = arith.constant 0 : index
    %c0_49 = arith.constant 0 : index
    %63 = vector.load %arg18[%c0_48, %c0_49] : memref<256x32xf32, #tpu.memory_space<vmem>>, vector<256x32xf32>
    tpu.vector_store %arg18[%c0_48, %c0_49], %62 {strides = array<i32>} : memref<256x32xf32, #tpu.memory_space<vmem>>, vector<256x32xf32>,
    return
  }
  func.func @transform_0(%arg0: i32) -> (i32, i32) {
    %c0_i32 = arith.constant 0 : i32
    %c0_i32_0 = arith.constant 0 : i32
    return %arg0, %c0_i32 : i32, i32
  }
  func.func @transform_1(%arg0: i32) -> (i32, i32) {
    %c0_i32 = arith.constant 0 : i32
    %c0_i32_0 = arith.constant 0 : i32
    %c0_i32_1 = arith.constant 0 : i32
    return %c0_i32, %c0_i32_0 : i32, i32
  }
  func.func @transform_2(%arg0: i32) -> (i32, i32) {
    %c0_i32 = arith.constant 0 : i32
    %c0_i32_0 = arith.constant 0 : i32
    %c0_i32_1 = arith.constant 0 : i32
    return %c0_i32, %c0_i32_0 : i32, i32
  }
  func.func @transform_3(%arg0: i32) -> (i32, i32) {
    %c0_i32 = arith.constant 0 : i32
    %c0_i32_0 = arith.constant 0 : i32
    %c0_i32_1 = arith.constant 0 : i32
    return %c0_i32, %c0_i32_0 : i32, i32
  }
  func.func @transform_4(%arg0: i32) -> (i32, i32) {
    %c0_i32 = arith.constant 0 : i32
    %c0_i32_0 = arith.constant 0 : i32
    %c0_i32_1 = arith.constant 0 : i32
    return %c0_i32, %c0_i32_0 : i32, i32
  }
  func.func @transform_5(%arg0: i32) -> (i32, i32) {
    %c0_i32 = arith.constant 0 : i32
    %c0_i32_0 = arith.constant 0 : i32
    %c0_i32_1 = arith.constant 0 : i32
    return %c0_i32, %c0_i32_0 : i32, i32
  }
  func.func @transform_6(%arg0: i32) -> (i32, i32) {
    %c0_i32 = arith.constant 0 : i32
    %c0_i32_0 = arith.constant 0 : i32
    %c0_i32_1 = arith.constant 0 : i32
    return %c0_i32, %c0_i32_0 : i32, i32
  }
  func.func @transform_7(%arg0: i32) -> (i32, i32) {
    %c0_i32 = arith.constant 0 : i32
    %c0_i32_0 = arith.constant 0 : i32
    %c0_i32_1 = arith.constant 0 : i32
    return %c0_i32, %c0_i32_0 : i32, i32
  }
  func.func @transform_8(%arg0: i32) -> (i32, i32) {
    %c0_i32 = arith.constant 0 : i32
    %c0_i32_0 = arith.constant 0 : i32
    %c0_i32_1 = arith.constant 0 : i32
    return %c0_i32, %c0_i32_0 : i32, i32
  }
  func.func @transform_9(%arg0: i32) -> (i32, i32) {
    %c0_i32 = arith.constant 0 : i32
    %c0_i32_0 = arith.constant 0 : i32
    %c0_i32_1 = arith.constant 0 : i32
    return %c0_i32, %c0_i32_0 : i32, i32
  }
  func.func @transform_10(%arg0: i32) -> (i32, i32) {
    %c0_i32 = arith.constant 0 : i32
    %c0_i32_0 = arith.constant 0 : i32
    %c0_i32_1 = arith.constant 0 : i32
    return %c0_i32, %c0_i32_0 : i32, i32
  }
  func.func @transform_11(%arg0: i32) -> (i32, i32) {
    %c0_i32 = arith.constant 0 : i32
    %c0_i32_0 = arith.constant 0 : i32
    %c0_i32_1 = arith.constant 0 : i32
    return %c0_i32, %c0_i32_0 : i32, i32
  }
  func.func @transform_12(%arg0: i32) -> (i32, i32) {
    %c0_i32 = arith.constant 0 : i32
    %c0_i32_0 = arith.constant 0 : i32
    %c0_i32_1 = arith.constant 0 : i32
    return %c0_i32, %c0_i32_0 : i32, i32
  }
  func.func @transform_13(%arg0: i32) -> (i32, i32) {
    %c0_i32 = arith.constant 0 : i32
    %c0_i32_0 = arith.constant 0 : i32
    %c0_i32_1 = arith.constant 0 : i32
    return %c0_i32, %c0_i32_0 : i32, i32
  }
  func.func @transform_14(%arg0: i32) -> (i32, i32) {
    %c0_i32 = arith.constant 0 : i32
    %c0_i32_0 = arith.constant 0 : i32
    %c0_i32_1 = arith.constant 0 : i32
    return %c0_i32, %c0_i32_0 : i32, i32
  }
  func.func @transform_15(%arg0: i32) -> (i32, i32) {
    %c0_i32 = arith.constant 0 : i32
    %c0_i32_0 = arith.constant 0 : i32
    %c0_i32_1 = arith.constant 0 : i32
    return %c0_i32, %c0_i32_0 : i32, i32
  }
  func.func @transform_16(%arg0: i32) -> (i32, i32) {
    %c0_i32 = arith.constant 0 : i32
    %c0_i32_0 = arith.constant 0 : i32
    %c0_i32_1 = arith.constant 0 : i32
    return %c0_i32, %c0_i32_0 : i32, i32
  }
  func.func @transform_17(%arg0: i32) -> (i32, i32) {
    %c0_i32 = arith.constant 0 : i32
    %c0_i32_0 = arith.constant 0 : i32
    return %arg0, %c0_i32 : i32, i32
  }
  func.func @transform_18(%arg0: i32) -> (i32, i32) {
    %c0_i32 = arith.constant 0 : i32
    %c0_i32_0 = arith.constant 0 : i32
    return %arg0, %c0_i32 : i32, i32
  }
}

</mosaic_0001>

<llo_original>
// kernel: tpu_custom_call.1
$region0: #{tpu_custom_call.1}
  #allocation0 [shape = 'u32[]', space=smem, size = 0x4, offset = 0x4, fixed_abs, tag = 'smem constant byte address 0x4 - core index']
  #allocation1 [shape = 'u32[144,128]{1,0:T(1,128)}', space=vmem, size = 0x12000, scoped, tag = 'internal scratch']
  %s0 = inlined_call_operand.vmem [shape: f32[256,32], index: 0, kind: input, shape index: {}]
  %s1 = inlined_call_operand.vmem [shape: bf16[32,256], index: 1, kind: input, shape index: {}]
  %s2 = inlined_call_operand.vmem [shape: f32[1,256], index: 2, kind: input, shape index: {}]
  %s3 = inlined_call_operand.vmem [shape: bf16[256,128], index: 3, kind: input, shape index: {}]
  %s4 = inlined_call_operand.vmem [shape: f32[1,128], index: 4, kind: input, shape index: {}]
  %s5 = inlined_call_operand.vmem [shape: bf16[128,64], index: 5, kind: input, shape index: {}]
  %s6 = inlined_call_operand.vmem [shape: f32[1,64], index: 6, kind: input, shape index: {}]
  %s7 = inlined_call_operand.vmem [shape: bf16[64,128], index: 7, kind: input, shape index: {}]
  %s8 = inlined_call_operand.vmem [shape: f32[1,128], index: 8, kind: input, shape index: {}]
  %s9 = inlined_call_operand.vmem [shape: bf16[128,64], index: 9, kind: input, shape index: {}]
  %s10 = inlined_call_operand.vmem [shape: f32[1,64], index: 10, kind: input, shape index: {}]
  %s11 = inlined_call_operand.vmem [shape: bf16[64,128], index: 11, kind: input, shape index: {}]
  %s12 = inlined_call_operand.vmem [shape: f32[1,128], index: 12, kind: input, shape index: {}]
  %s13 = inlined_call_operand.vmem [shape: bf16[128,256], index: 13, kind: input, shape index: {}]
  %s14 = inlined_call_operand.vmem [shape: f32[1,256], index: 14, kind: input, shape index: {}]
  %s15 = inlined_call_operand.vmem [shape: bf16[256,32], index: 15, kind: input, shape index: {}]
  %s16 = inlined_call_operand.vmem [shape: f32[1,32], index: 16, kind: input, shape index: {}]
  %s17 = inlined_call_operand.vmem [shape: f32[256,32], index: 17, kind: output, shape index: {0}]
  %s18 = inlined_call_operand.vmem [shape: f32[256,9], index: 18, kind: output, shape index: {1}]
  %19 = xla_tuple %s17, %s18
  %s20 = sld [smem:[#allocation0]]
  $region86: #{tpu_custom_call.1} parent=0
    _
  %s22 = ssub.s32 1, %s20
  %s23 = scalar_select 0, %s22, %s20
  // Predicated region
  $region2: #{tpu_custom_call.1} parent=0 // pred_check
    _
  $region3: #{tpu_custom_call.1} parent=0 // pred_check_branch
    %25 = sbr.rel (0) target = $region5
  $region4: #{tpu_custom_call.1} parent=0 // pred_region
    _
  $region5: #{tpu_custom_call.1} parent=0 // pred_fallthru
    _
  // Predicated region
  $region6: #{tpu_custom_call.1} parent=0 // pred_check
    _
  $region7: #{tpu_custom_call.1} parent=0 // pred_check_branch
    %27 = sbr.rel (0) target = $region9
  $region8: #{tpu_custom_call.1} parent=0 // pred_region
    _
  $region9: #{tpu_custom_call.1} parent=0 // pred_fallthru
    _
  // Predicated region
  $region10: #{tpu_custom_call.1} parent=0 // pred_check
    _
  $region11: #{tpu_custom_call.1} parent=0 // pred_check_branch
    %29 = sbr.rel (0) target = $region13
  $region12: #{tpu_custom_call.1} parent=0 // pred_region
    _
  $region13: #{tpu_custom_call.1} parent=0 // pred_fallthru
    _
  // Predicated region
  $region14: #{tpu_custom_call.1} parent=0 // pred_check
    _
  $region15: #{tpu_custom_call.1} parent=0 // pred_check_branch
    %31 = sbr.rel (0) target = $region17
  $region16: #{tpu_custom_call.1} parent=0 // pred_region
    _
  $region17: #{tpu_custom_call.1} parent=0 // pred_fallthru
    _
  // Predicated region
  $region18: #{tpu_custom_call.1} parent=0 // pred_check
    _
  $region19: #{tpu_custom_call.1} parent=0 // pred_check_branch
    %33 = sbr.rel (0) target = $region21
  $region20: #{tpu_custom_call.1} parent=0 // pred_region
    _
  $region21: #{tpu_custom_call.1} parent=0 // pred_fallthru
    _
  // Predicated region
  $region22: #{tpu_custom_call.1} parent=0 // pred_check
    _
  $region23: #{tpu_custom_call.1} parent=0 // pred_check_branch
    %35 = sbr.rel (0) target = $region25
  $region24: #{tpu_custom_call.1} parent=0 // pred_region
    _
  $region25: #{tpu_custom_call.1} parent=0 // pred_fallthru
    _
  // Predicated region
  $region26: #{tpu_custom_call.1} parent=0 // pred_check
    _
  $region27: #{tpu_custom_call.1} parent=0 // pred_check_branch
    %37 = sbr.rel (0) target = $region29
  $region28: #{tpu_custom_call.1} parent=0 // pred_region
    _
  $region29: #{tpu_custom_call.1} parent=0 // pred_fallthru
    _
  // Predicated region
  $region30: #{tpu_custom_call.1} parent=0 // pred_check
    _
  $region31: #{tpu_custom_call.1} parent=0 // pred_check_branch
    %39 = sbr.rel (0) target = $region33
  $region32: #{tpu_custom_call.1} parent=0 // pred_region
    _
  $region33: #{tpu_custom_call.1} parent=0 // pred_fallthru
    _
  // Predicated region
  $region34: #{tpu_custom_call.1} parent=0 // pred_check
    _
  $region35: #{tpu_custom_call.1} parent=0 // pred_check_branch
    %41 = sbr.rel (0) target = $region37
  $region36: #{tpu_custom_call.1} parent=0 // pred_region
    _
  $region37: #{tpu_custom_call.1} parent=0 // pred_fallthru
    _
  // Predicated region
  $region38: #{tpu_custom_call.1} parent=0 // pred_check
    _
  $region39: #{tpu_custom_call.1} parent=0 // pred_check_branch
    %43 = sbr.rel (0) target = $region41
  $region40: #{tpu_custom_call.1} parent=0 // pred_region
    _
  $region41: #{tpu_custom_call.1} parent=0 // pred_fallthru
    _
  // Predicated region
  $region42: #{tpu_custom_call.1} parent=0 // pred_check
    _
  $region43: #{tpu_custom_call.1} parent=0 // pred_check_branch
    %45 = sbr.rel (0) target = $region45
  $region44: #{tpu_custom_call.1} parent=0 // pred_region
    _
  $region45: #{tpu_custom_call.1} parent=0 // pred_fallthru
    _
  // Predicated region
  $region46: #{tpu_custom_call.1} parent=0 // pred_check
    _
  $region47: #{tpu_custom_call.1} parent=0 // pred_check_branch
    %47 = sbr.rel (0) target = $region49
  $region48: #{tpu_custom_call.1} parent=0 // pred_region
    _
  $region49: #{tpu_custom_call.1} parent=0 // pred_fallthru
    _
  // Predicated region
  $region50: #{tpu_custom_call.1} parent=0 // pred_check
    _
  $region51: #{tpu_custom_call.1} parent=0 // pred_check_branch
    %49 = sbr.rel (0) target = $region53
  $region52: #{tpu_custom_call.1} parent=0 // pred_region
    _
  $region53: #{tpu_custom_call.1} parent=0 // pred_fallthru
    _
  // Predicated region
  $region54: #{tpu_custom_call.1} parent=0 // pred_check
    _
  $region55: #{tpu_custom_call.1} parent=0 // pred_check_branch
    %51 = sbr.rel (0) target = $region57
  $region56: #{tpu_custom_call.1} parent=0 // pred_region
    _
  $region57: #{tpu_custom_call.1} parent=0 // pred_fallthru
    _
  // Predicated region
  $region58: #{tpu_custom_call.1} parent=0 // pred_check
    _
  $region59: #{tpu_custom_call.1} parent=0 // pred_check_branch
    %53 = sbr.rel (0) target = $region61
  $region60: #{tpu_custom_call.1} parent=0 // pred_region
    _
  $region61: #{tpu_custom_call.1} parent=0 // pred_fallthru
    _
  // Predicated region
  $region62: #{tpu_custom_call.1} parent=0 // pred_check
    _
  $region63: #{tpu_custom_call.1} parent=0 // pred_check_branch
    %55 = sbr.rel (0) target = $region65
  $region64: #{tpu_custom_call.1} parent=0 // pred_region
    _
  $region65: #{tpu_custom_call.1} parent=0 // pred_fallthru
    _
  // Predicated region
  $region66: #{tpu_custom_call.1} parent=0 // pred_check
    _
  $region67: #{tpu_custom_call.1} parent=0 // pred_check_branch
    %57 = sbr.rel (0) target = $region69
  $region68: #{tpu_custom_call.1} parent=0 // pred_region
    _
  $region69: #{tpu_custom_call.1} parent=0 // pred_fallthru
    _
  %v59 = vld [vmem:[%s0] sm:$0xff]
  %v60 = vld [vmem:[%s0 + $0x8] sm:$0xff]
  %v61 = vld [vmem:[%s0 + $0x10] sm:$0xff]
  %v62 = vld [vmem:[%s0 + $0x18] sm:$0xff]
  %v63 = vld [vmem:[%s0 + $0x20] sm:$0xff]
  %v64 = vld [vmem:[%s0 + $0x28] sm:$0xff]
  %v65 = vld [vmem:[%s0 + $0x30] sm:$0xff]
  %v66 = vld [vmem:[%s0 + $0x38] sm:$0xff]
  %v67 = vld [vmem:[%s0 + $0x40] sm:$0xff]
  %v68 = vld [vmem:[%s0 + $0x48] sm:$0xff]
  %v69 = vld [vmem:[%s0 + $0x50] sm:$0xff]
  %v70 = vld [vmem:[%s0 + $0x58] sm:$0xff]
  %v71 = vld [vmem:[%s0 + $0x60] sm:$0xff]
  %v72 = vld [vmem:[%s0 + $0x68] sm:$0xff]
  %v73 = vld [vmem:[%s0 + $0x70] sm:$0xff]
  %v74 = vld [vmem:[%s0 + $0x78] sm:$0xff]
  %v75 = vld [vmem:[%s0 + $0x80] sm:$0xff]
  %v76 = vld [vmem:[%s0 + $0x88] sm:$0xff]
  %v77 = vld [vmem:[%s0 + $0x90] sm:$0xff]
  %v78 = vld [vmem:[%s0 + $0x98] sm:$0xff]
  %v79 = vld [vmem:[%s0 + $0xa0] sm:$0xff]
  %v80 = vld [vmem:[%s0 + $0xa8] sm:$0xff]
  %v81 = vld [vmem:[%s0 + $0xb0] sm:$0xff]
  %v82 = vld [vmem:[%s0 + $0xb8] sm:$0xff]
  %v83 = vld [vmem:[%s0 + $0xc0] sm:$0xff]
  %v84 = vld [vmem:[%s0 + $0xc8] sm:$0xff]
  %v85 = vld [vmem:[%s0 + $0xd0] sm:$0xff]
  %v86 = vld [vmem:[%s0 + $0xd8] sm:$0xff]
  %v87 = vld [vmem:[%s0 + $0xe0] sm:$0xff]
  %v88 = vld [vmem:[%s0 + $0xe8] sm:$0xff]
  %v89 = vld [vmem:[%s0 + $0xf0] sm:$0xff]
  %v90 = vld [vmem:[%s0 + $0xf8] sm:$0xff]
  %v91 = vpack.c.bf16 %v60, %v59
  %v92 = vpack.c.bf16 %v62, %v61
  %v93 = vpack.c.bf16 %v64, %v63
  %v94 = vpack.c.bf16 %v66, %v65
  %v95 = vpack.c.bf16 %v68, %v67
  %v96 = vpack.c.bf16 %v70, %v69
  %v97 = vpack.c.bf16 %v72, %v71
  %v98 = vpack.c.bf16 %v74, %v73
  %v99 = vpack.c.bf16 %v76, %v75
  %v100 = vpack.c.bf16 %v78, %v77
  %v101 = vpack.c.bf16 %v80, %v79
  %v102 = vpack.c.bf16 %v82, %v81
  %v103 = vpack.c.bf16 %v84, %v83
  %v104 = vpack.c.bf16 %v86, %v85
  %v105 = vpack.c.bf16 %v88, %v87
  %v106 = vpack.c.bf16 %v90, %v89
  %v107 = vld [vmem:[%s1] sm:$0xff]
  %v108 = vld [vmem:[%s1 + $0x8] sm:$0xff]
  %v109 = vld [vmem:[%s1 + $0x10] sm:$0xff]
  %v110 = vld [vmem:[%s1 + $0x18] sm:$0xff]
  %v111 = vld [vmem:[%s2] sm:$0x3]
  %v113 = vlaneseq
  %v114 = vshrl.u32 %v113, 7
  %v115 = vsub.s32 0, %v114
  %v116 = vrot.slane %v111, %v115
  %v117 = vlaneseq
  %v118 = vshrl.u32 %v117, 7
  %v119 = vsub.s32 1, %v118
  %v120 = vrot.slane %v111, %v119
  %v127 = vunpack.c.l.b16 %v107
  %v128 = vunpack.c.h.b16 %v107
  %v129 = vunpack.c.l.b16 %v108
  %v130 = vunpack.c.h.b16 %v108
  %v131 = vunpack.c.l.b16 %v109
  %v132 = vunpack.c.h.b16 %v109
  %v133 = vunpack.c.l.b16 %v110
  %v134 = vunpack.c.h.b16 %v110
  %v135 = vpack.c.b16 %v129, %v127
  %v136 = vpack.c.b16 %v130, %v128
  %v137 = vpack.c.b16 %v133, %v131
  %v138 = vpack.c.b16 %v134, %v132
  %vm143 = vcmask 261120
  %v145 = vsel %vm143, %v91, 0
  %v148 = vsel %vm143, %v92, 0
  %v151 = vsel %vm143, %v93, 0
  %v154 = vsel %vm143, %v94, 0
  %v157 = vsel %vm143, %v95, 0
  %v160 = vsel %vm143, %v96, 0
  %v163 = vsel %vm143, %v97, 0
  %v166 = vsel %vm143, %v98, 0
  %v169 = vsel %vm143, %v99, 0
  %v172 = vsel %vm143, %v100, 0
  %v175 = vsel %vm143, %v101, 0
  %v178 = vsel %vm143, %v102, 0
  %v181 = vsel %vm143, %v103, 0
  %v184 = vsel %vm143, %v104, 0
  %v187 = vsel %vm143, %v105, 0
  %v190 = vsel %vm143, %v106, 0
  %192 = vmatprep.subr.bf16.mxu0 0
  %193 = vmatpush1.bf16.msra.mxu0 0
  %194 = vmatprep.subr.bf16.mxu0 0
  %195 = vmatpush1.bf16.msra.mxu0 0
  %196 = vmatprep.subr.bf16.mxu0 0
  %197 = vmatpush1.bf16.msra.mxu0 0
  %198 = vmatprep.subr.bf16.mxu0 0
  %199 = vmatpush1.bf16.msra.mxu0 0
  %200 = vmatprep.subr.bf16.mxu0 0
  %201 = vmatpush1.bf16.msra.mxu0 0
  %202 = vmatprep.subr.bf16.mxu0 0
  %203 = vmatpush1.bf16.msra.mxu0 0
  %204 = vmatprep.subr.bf16.mxu0 %v138
  %205 = vmatpush1.bf16.msra.mxu0 %v137
  %206 = vmatprep.subr.bf16.mxu0 %v136
  %207 = vmatpush1.bf16.msra.mxu0 %v135
  %208 = vmatprep.subr.bf16.mxu0 0
  %209 = vmatpush2.bf16.msra.mxu0 0
  %210 = vmatprep.subr.bf16.mxu0 0
  %211 = vmatpush2.bf16.msra.mxu0 0
  %212 = vmatprep.subr.bf16.mxu0 0
  %213 = vmatpush2.bf16.msra.mxu0 0
  %214 = vmatprep.subr.bf16.mxu0 0
  %215 = vmatpush2.bf16.msra.mxu0 0
  %216 = vmatprep.subr.bf16.mxu0 0
  %217 = vmatpush2.bf16.msra.mxu0 0
  %218 = vmatprep.subr.bf16.mxu0 0
  %219 = vmatpush2.bf16.msra.mxu0 0
  %220 = vmatprep.subr.bf16.mxu0 0
  %221 = vmatpush2.bf16.msra.mxu0 0
  %222 = vmatprep.subr.bf16.mxu0 0
  %223 = vmatpush2.bf16.msra.mxu0 0
  %224 = vmatprep.mubr.bf16.mxu0 0
  %225 = vmatmul.mubr.bf16.gmra.mxu0 %v145
  %v226 = vpop.f32.mrf.mxu0
  %v227 = vadd.f32 %v116, %v226
  %v228 = vpop.f32.mrf.mxu0
  %v229 = vadd.f32 %v120, %v228
  %v230 = vpop.f32.mrf.mxu0
  %v231 = vadd.f32 %v116, %v230
  %v232 = vpop.f32.mrf.mxu0
  %v233 = vadd.f32 %v120, %v232
  %234 = vmatprep.mubr.bf16.mxu0 0
  %235 = vmatmul.mubr.bf16.gmra.mxu0 %v148
  %v236 = vpop.f32.mrf.mxu0
  %v237 = vadd.f32 %v116, %v236
  %v238 = vpop.f32.mrf.mxu0
  %v239 = vadd.f32 %v120, %v238
  %v240 = vpop.f32.mrf.mxu0
  %v241 = vadd.f32 %v116, %v240
  %v242 = vpop.f32.mrf.mxu0
  %v243 = vadd.f32 %v120, %v242
  %244 = vmatprep.mubr.bf16.mxu0 0
  %245 = vmatmul.mubr.bf16.gmra.mxu0 %v151
  %v246 = vpop.f32.mrf.mxu0
  %v247 = vadd.f32 %v116, %v246
  %v248 = vpop.f32.mrf.mxu0
  %v249 = vadd.f32 %v120, %v248
  %v250 = vpop.f32.mrf.mxu0
  %v251 = vadd.f32 %v116, %v250
  %v252 = vpop.f32.mrf.mxu0
  %v253 = vadd.f32 %v120, %v252
  %254 = vmatprep.mubr.bf16.mxu0 0
  %255 = vmatmul.mubr.bf16.gmra.mxu0 %v154
  %v256 = vpop.f32.mrf.mxu0
  %v257 = vadd.f32 %v116, %v256
  %v258 = vpop.f32.mrf.mxu0
  %v259 = vadd.f32 %v120, %v258
  %v260 = vpop.f32.mrf.mxu0
  %v261 = vadd.f32 %v116, %v260
  %v262 = vpop.f32.mrf.mxu0
  %v263 = vadd.f32 %v120, %v262
  %264 = vmatprep.mubr.bf16.mxu0 0
  %265 = vmatmul.mubr.bf16.gmra.mxu0 %v157
  %v266 = vpop.f32.mrf.mxu0
  %v267 = vadd.f32 %v116, %v266
  %v268 = vpop.f32.mrf.mxu0
  %v269 = vadd.f32 %v120, %v268
  %v270 = vpop.f32.mrf.mxu0
  %v271 = vadd.f32 %v116, %v270
  %v272 = vpop.f32.mrf.mxu0
  %v273 = vadd.f32 %v120, %v272
  %274 = vmatprep.mubr.bf16.mxu0 0
  %275 = vmatmul.mubr.bf16.gmra.mxu0 %v160
  %v276 = vpop.f32.mrf.mxu0
  %v277 = vadd.f32 %v116, %v276
  %v278 = vpop.f32.mrf.mxu0
  %v279 = vadd.f32 %v120, %v278
  %v280 = vpop.f32.mrf.mxu0
  %v281 = vadd.f32 %v116, %v280
  %v282 = vpop.f32.mrf.mxu0
  %v283 = vadd.f32 %v120, %v282
  %284 = vmatprep.mubr.bf16.mxu0 0
  %285 = vmatmul.mubr.bf16.gmra.mxu0 %v163
  %v286 = vpop.f32.mrf.mxu0
  %v287 = vadd.f32 %v116, %v286
  %v288 = vpop.f32.mrf.mxu0
  %v289 = vadd.f32 %v120, %v288
  %v290 = vpop.f32.mrf.mxu0
  %v291 = vadd.f32 %v116, %v290
  %v292 = vpop.f32.mrf.mxu0
  %v293 = vadd.f32 %v120, %v292
  %294 = vmatprep.mubr.bf16.mxu0 0
  %295 = vmatmul.mubr.bf16.gmra.mxu0 %v166
  %v296 = vpop.f32.mrf.mxu0
  %v297 = vadd.f32 %v116, %v296
  %v298 = vpop.f32.mrf.mxu0
  %v299 = vadd.f32 %v120, %v298
  %v300 = vpop.f32.mrf.mxu0
  %v301 = vadd.f32 %v116, %v300
  %v302 = vpop.f32.mrf.mxu0
  %v303 = vadd.f32 %v120, %v302
  %304 = vmatprep.mubr.bf16.mxu0 0
  %305 = vmatmul.mubr.bf16.gmra.mxu0 %v169
  %v306 = vpop.f32.mrf.mxu0
  %v307 = vadd.f32 %v116, %v306
  %v308 = vpop.f32.mrf.mxu0
  %v309 = vadd.f32 %v120, %v308
  %v310 = vpop.f32.mrf.mxu0
  %v311 = vadd.f32 %v116, %v310
  %v312 = vpop.f32.mrf.mxu0
  %v313 = vadd.f32 %v120, %v312
  %314 = vmatprep.mubr.bf16.mxu0 0
  %315 = vmatmul.mubr.bf16.gmra.mxu0 %v172
  %v316 = vpop.f32.mrf.mxu0
  %v317 = vadd.f32 %v116, %v316
  %v318 = vpop.f32.mrf.mxu0
  %v319 = vadd.f32 %v120, %v318
  %v320 = vpop.f32.mrf.mxu0
  %v321 = vadd.f32 %v116, %v320
  %v322 = vpop.f32.mrf.mxu0
  %v323 = vadd.f32 %v120, %v322
  %324 = vmatprep.mubr.bf16.mxu0 0
  %325 = vmatmul.mubr.bf16.gmra.mxu0 %v175
  %v326 = vpop.f32.mrf.mxu0
  %v327 = vadd.f32 %v116, %v326
  %v328 = vpop.f32.mrf.mxu0
  %v329 = vadd.f32 %v120, %v328
  %v330 = vpop.f32.mrf.mxu0
  %v331 = vadd.f32 %v116, %v330
  %v332 = vpop.f32.mrf.mxu0
  %v333 = vadd.f32 %v120, %v332
  %334 = vmatprep.mubr.bf16.mxu0 0
  %335 = vmatmul.mubr.bf16.gmra.mxu0 %v178
  %v336 = vpop.f32.mrf.mxu0
  %v337 = vadd.f32 %v116, %v336
  %v338 = vpop.f32.mrf.mxu0
  %v339 = vadd.f32 %v120, %v338
  %v340 = vpop.f32.mrf.mxu0
  %v341 = vadd.f32 %v116, %v340
  %v342 = vpop.f32.mrf.mxu0
  %v343 = vadd.f32 %v120, %v342
  %344 = vmatprep.mubr.bf16.mxu0 0
  %345 = vmatmul.mubr.bf16.gmra.mxu0 %v181
  %v346 = vpop.f32.mrf.mxu0
  %v347 = vadd.f32 %v116, %v346
  %v348 = vpop.f32.mrf.mxu0
  %v349 = vadd.f32 %v120, %v348
  %v350 = vpop.f32.mrf.mxu0
  %v351 = vadd.f32 %v116, %v350
  %v352 = vpop.f32.mrf.mxu0
  %v353 = vadd.f32 %v120, %v352
  %354 = vmatprep.mubr.bf16.mxu0 0
  %355 = vmatmul.mubr.bf16.gmra.mxu0 %v184
  %v356 = vpop.f32.mrf.mxu0
  %v357 = vadd.f32 %v116, %v356
  %v358 = vpop.f32.mrf.mxu0
  %v359 = vadd.f32 %v120, %v358
  %v360 = vpop.f32.mrf.mxu0
  %v361 = vadd.f32 %v116, %v360
  %v362 = vpop.f32.mrf.mxu0
  %v363 = vadd.f32 %v120, %v362
  %364 = vmatprep.mubr.bf16.mxu0 0
  %365 = vmatmul.mubr.bf16.gmra.mxu0 %v187
  %v366 = vpop.f32.mrf.mxu0
  %v367 = vadd.f32 %v116, %v366
  %v368 = vpop.f32.mrf.mxu0
  %v369 = vadd.f32 %v120, %v368
  %v370 = vpop.f32.mrf.mxu0
  %v371 = vadd.f32 %v116, %v370
  %v372 = vpop.f32.mrf.mxu0
  %v373 = vadd.f32 %v120, %v372
  %374 = vmatprep.mubr.bf16.mxu0 0
  %375 = vmatmul.mubr.bf16.gmra.mxu0 %v190
  %v376 = vpop.f32.mrf.mxu0
  %v377 = vadd.f32 %v116, %v376
  %v378 = vpop.f32.mrf.mxu0
  %v379 = vadd.f32 %v120, %v378
  %v380 = vpop.f32.mrf.mxu0
  %v381 = vadd.f32 %v116, %v380
  %v382 = vpop.f32.mrf.mxu0
  %v383 = vadd.f32 %v120, %v382
  %384 = vdwg.mxu0
  %v385 = vmax.f32 %v227, 0.0
  %v386 = vmax.f32 %v229, 0.0
  %v387 = vmax.f32 %v231, 0.0
  %v388 = vmax.f32 %v233, 0.0
  %v389 = vmax.f32 %v237, 0.0
  %v390 = vmax.f32 %v239, 0.0
  %v391 = vmax.f32 %v241, 0.0
  %v392 = vmax.f32 %v243, 0.0
  %v393 = vmax.f32 %v247, 0.0
  %v394 = vmax.f32 %v249, 0.0
  %v395 = vmax.f32 %v251, 0.0
  %v396 = vmax.f32 %v253, 0.0
  %v397 = vmax.f32 %v257, 0.0
  %v398 = vmax.f32 %v259, 0.0
  %v399 = vmax.f32 %v261, 0.0
  %v400 = vmax.f32 %v263, 0.0
  %v401 = vmax.f32 %v267, 0.0
  %v402 = vmax.f32 %v269, 0.0
  %v403 = vmax.f32 %v271, 0.0
  %v404 = vmax.f32 %v273, 0.0
  %v405 = vmax.f32 %v277, 0.0
  %v406 = vmax.f32 %v279, 0.0
  %v407 = vmax.f32 %v281, 0.0
  %v408 = vmax.f32 %v283, 0.0
  %v409 = vmax.f32 %v287, 0.0
  %v410 = vmax.f32 %v289, 0.0
  %v411 = vmax.f32 %v291, 0.0
  %v412 = vmax.f32 %v293, 0.0
  %v413 = vmax.f32 %v297, 0.0
  %v414 = vmax.f32 %v299, 0.0
  %v415 = vmax.f32 %v301, 0.0
  %v416 = vmax.f32 %v303, 0.0
  %v417 = vmax.f32 %v307, 0.0
  %v418 = vmax.f32 %v309, 0.0
  %v419 = vmax.f32 %v311, 0.0
  %v420 = vmax.f32 %v313, 0.0
  %v421 = vmax.f32 %v317, 0.0
  %v422 = vmax.f32 %v319, 0.0
  %v423 = vmax.f32 %v321, 0.0
  %v424 = vmax.f32 %v323, 0.0
  %v425 = vmax.f32 %v327, 0.0
  %v426 = vmax.f32 %v329, 0.0
  %v427 = vmax.f32 %v331, 0.0
  %v428 = vmax.f32 %v333, 0.0
  %v429 = vmax.f32 %v337, 0.0
  %v430 = vmax.f32 %v339, 0.0
  %v431 = vmax.f32 %v341, 0.0
  %v432 = vmax.f32 %v343, 0.0
  %v433 = vmax.f32 %v347, 0.0
  %v434 = vmax.f32 %v349, 0.0
  %v435 = vmax.f32 %v351, 0.0
  %v436 = vmax.f32 %v353, 0.0
  %v437 = vmax.f32 %v357, 0.0
  %v438 = vmax.f32 %v359, 0.0
  %v439 = vmax.f32 %v361, 0.0
  %v440 = vmax.f32 %v363, 0.0
  %v441 = vmax.f32 %v367, 0.0
  %v442 = vmax.f32 %v369, 0.0
  %v443 = vmax.f32 %v371, 0.0
  %v444 = vmax.f32 %v373, 0.0
  %v445 = vmax.f32 %v377, 0.0
  %v446 = vmax.f32 %v379, 0.0
  %v447 = vmax.f32 %v381, 0.0
  %v448 = vmax.f32 %v383, 0.0
  %v449 = vpack.c.bf16 %v387, %v385
  %v450 = vpack.c.bf16 %v388, %v386
  %v451 = vpack.c.bf16 %v391, %v389
  %v452 = vpack.c.bf16 %v392, %v390
  %v453 = vpack.c.bf16 %v395, %v393
  %v454 = vpack.c.bf16 %v396, %v394
  %v455 = vpack.c.bf16 %v399, %v397
  %v456 = vpack.c.bf16 %v400, %v398
  %v457 = vpack.c.bf16 %v403, %v401
  %v458 = vpack.c.bf16 %v404, %v402
  %v459 = vpack.c.bf16 %v407, %v405
  %v460 = vpack.c.bf16 %v408, %v406
  %v461 = vpack.c.bf16 %v411, %v409
  %v462 = vpack.c.bf16 %v412, %v410
  %v463 = vpack.c.bf16 %v415, %v413
  %v464 = vpack.c.bf16 %v416, %v414
  %v465 = vpack.c.bf16 %v419, %v417
  %v466 = vpack.c.bf16 %v420, %v418
  %v467 = vpack.c.bf16 %v423, %v421
  %v468 = vpack.c.bf16 %v424, %v422
  %v469 = vpack.c.bf16 %v427, %v425
  %v470 = vpack.c.bf16 %v428, %v426
  %v471 = vpack.c.bf16 %v431, %v429
  %v472 = vpack.c.bf16 %v432, %v430
  %v473 = vpack.c.bf16 %v435, %v433
  %v474 = vpack.c.bf16 %v436, %v434
  %v475 = vpack.c.bf16 %v439, %v437
  %v476 = vpack.c.bf16 %v440, %v438
  %v477 = vpack.c.bf16 %v443, %v441
  %v478 = vpack.c.bf16 %v444, %v442
  %v479 = vpack.c.bf16 %v447, %v445
  %v480 = vpack.c.bf16 %v448, %v446
  %v481 = vld [vmem:[%s3] sm:$0xf]
  %v482 = vld [vmem:[%s3 + $0x4] sm:$0xf]
  %v483 = vld [vmem:[%s3 + $0x8] sm:$0xf]
  %v484 = vld [vmem:[%s3 + $0xc] sm:$0xf]
  %v485 = vld [vmem:[%s3 + $0x10] sm:$0xf]
  %v486 = vld [vmem:[%s3 + $0x14] sm:$0xf]
  %v487 = vld [vmem:[%s3 + $0x18] sm:$0xf]
  %v488 = vld [vmem:[%s3 + $0x1c] sm:$0xf]
  %v489 = vld [vmem:[%s3 + $0x20] sm:$0xf]
  %v490 = vld [vmem:[%s3 + $0x24] sm:$0xf]
  %v491 = vld [vmem:[%s3 + $0x28] sm:$0xf]
  %v492 = vld [vmem:[%s3 + $0x2c] sm:$0xf]
  %v493 = vld [vmem:[%s3 + $0x30] sm:$0xf]
  %v494 = vld [vmem:[%s3 + $0x34] sm:$0xf]
  %v495 = vld [vmem:[%s3 + $0x38] sm:$0xf]
  %v496 = vld [vmem:[%s3 + $0x3c] sm:$0xf]
  %v497 = vld [vmem:[%s3 + $0x40] sm:$0xf]
  %v498 = vld [vmem:[%s3 + $0x44] sm:$0xf]
  %v499 = vld [vmem:[%s3 + $0x48] sm:$0xf]
  %v500 = vld [vmem:[%s3 + $0x4c] sm:$0xf]
  %v501 = vld [vmem:[%s3 + $0x50] sm:$0xf]
  %v502 = vld [vmem:[%s3 + $0x54] sm:$0xf]
  %v503 = vld [vmem:[%s3 + $0x58] sm:$0xf]
  %v504 = vld [vmem:[%s3 + $0x5c] sm:$0xf]
  %v505 = vld [vmem:[%s3 + $0x60] sm:$0xf]
  %v506 = vld [vmem:[%s3 + $0x64] sm:$0xf]
  %v507 = vld [vmem:[%s3 + $0x68] sm:$0xf]
  %v508 = vld [vmem:[%s3 + $0x6c] sm:$0xf]
  %v509 = vld [vmem:[%s3 + $0x70] sm:$0xf]
  %v510 = vld [vmem:[%s3 + $0x74] sm:$0xf]
  %v511 = vld [vmem:[%s3 + $0x78] sm:$0xf]
  %v512 = vld [vmem:[%s3 + $0x7c] sm:$0xf]
  %v513 = vld [vmem:[%s4] sm:$0x1]
  %v515 = vlaneseq
  %v516 = vshrl.u32 %v515, 7
  %v517 = vsub.s32 0, %v516
  %v518 = vrot.slane %v513, %v517
  %v552 = vunpack.c.l.b16 %v481
  %v553 = vunpack.c.l.b16 %v482
  %v554 = vunpack.c.l.b16 %v483
  %v555 = vunpack.c.l.b16 %v484
  %v556 = vunpack.c.l.b16 %v485
  %v557 = vunpack.c.l.b16 %v486
  %v558 = vunpack.c.l.b16 %v487
  %v559 = vunpack.c.l.b16 %v488
  %v560 = vunpack.c.l.b16 %v489
  %v561 = vunpack.c.l.b16 %v490
  %v562 = vunpack.c.l.b16 %v491
  %v563 = vunpack.c.l.b16 %v492
  %v564 = vunpack.c.l.b16 %v493
  %v565 = vunpack.c.l.b16 %v494
  %v566 = vunpack.c.l.b16 %v495
  %v567 = vunpack.c.l.b16 %v496
  %v568 = vunpack.c.l.b16 %v497
  %v569 = vunpack.c.l.b16 %v498
  %v570 = vunpack.c.l.b16 %v499
  %v571 = vunpack.c.l.b16 %v500
  %v572 = vunpack.c.l.b16 %v501
  %v573 = vunpack.c.l.b16 %v502
  %v574 = vunpack.c.l.b16 %v503
  %v575 = vunpack.c.l.b16 %v504
  %v576 = vunpack.c.l.b16 %v505
  %v577 = vunpack.c.l.b16 %v506
  %v578 = vunpack.c.l.b16 %v507
  %v579 = vunpack.c.l.b16 %v508
  %v580 = vunpack.c.l.b16 %v509
  %v581 = vunpack.c.l.b16 %v510
  %v582 = vunpack.c.l.b16 %v511
  %v583 = vunpack.c.l.b16 %v512
  %v584 = vpack.c.b16 %v553, %v552
  %v585 = vpack.c.b16 %v555, %v554
  %v586 = vpack.c.b16 %v557, %v556
  %v587 = vpack.c.b16 %v559, %v558
  %v588 = vpack.c.b16 %v561, %v560
  %v589 = vpack.c.b16 %v563, %v562
  %v590 = vpack.c.b16 %v565, %v564
  %v591 = vpack.c.b16 %v567, %v566
  %v592 = vpack.c.b16 %v569, %v568
  %v593 = vpack.c.b16 %v571, %v570
  %v594 = vpack.c.b16 %v573, %v572
  %v595 = vpack.c.b16 %v575, %v574
  %v596 = vpack.c.b16 %v577, %v576
  %v597 = vpack.c.b16 %v579, %v578
  %v598 = vpack.c.b16 %v581, %v580
  %v599 = vpack.c.b16 %v583, %v582
  %616 = vmatprep.subr.bf16.mxu0 0
  %617 = vmatpush1.bf16.msra.mxu0 %v591
  %618 = vmatprep.subr.bf16.mxu0 0
  %619 = vmatpush1.bf16.msra.mxu0 %v590
  %620 = vmatprep.subr.bf16.mxu0 0
  %621 = vmatpush1.bf16.msra.mxu0 %v589
  %622 = vmatprep.subr.bf16.mxu0 0
  %623 = vmatpush1.bf16.msra.mxu0 %v588
  %624 = vmatprep.subr.bf16.mxu0 0
  %625 = vmatpush1.bf16.msra.mxu0 %v587
  %626 = vmatprep.subr.bf16.mxu0 0
  %627 = vmatpush1.bf16.msra.mxu0 %v586
  %628 = vmatprep.subr.bf16.mxu0 0
  %629 = vmatpush1.bf16.msra.mxu0 %v585
  %630 = vmatprep.subr.bf16.mxu0 0
  %631 = vmatpush1.bf16.msra.mxu0 %v584
  %632 = vmatprep.subr.bf16.mxu0 0
  %633 = vmatpush2.bf16.msra.mxu0 %v599
  %634 = vmatprep.subr.bf16.mxu0 0
  %635 = vmatpush2.bf16.msra.mxu0 %v598
  %636 = vmatprep.subr.bf16.mxu0 0
  %637 = vmatpush2.bf16.msra.mxu0 %v597
  %638 = vmatprep.subr.bf16.mxu0 0
  %639 = vmatpush2.bf16.msra.mxu0 %v596
  %640 = vmatprep.subr.bf16.mxu0 0
  %641 = vmatpush2.bf16.msra.mxu0 %v595
  %642 = vmatprep.subr.bf16.mxu0 0
  %643 = vmatpush2.bf16.msra.mxu0 %v594
  %644 = vmatprep.subr.bf16.mxu0 0
  %645 = vmatpush2.bf16.msra.mxu0 %v593
  %646 = vmatprep.subr.bf16.mxu0 0
  %647 = vmatpush2.bf16.msra.mxu0 %v592
  %648 = vmatprep.mubr.bf16.mxu0 %v450
  %649 = vmatmul.mubr.bf16.gmra.mxu0 %v449
  %v650 = vpop.f32.mrf.mxu0
  %v651 = vadd.f32 %v518, %v650
  %v652 = vpop.f32.mrf.mxu0
  %v653 = vpop.f32.mrf.mxu0
  %v654 = vadd.f32 %v518, %v653
  %v655 = vpop.f32.mrf.mxu0
  %656 = vmatprep.mubr.bf16.mxu0 %v452
  %657 = vmatmul.mubr.bf16.gmra.mxu0 %v451
  %v658 = vpop.f32.mrf.mxu0
  %v659 = vadd.f32 %v518, %v658
  %v660 = vpop.f32.mrf.mxu0
  %v661 = vpop.f32.mrf.mxu0
  %v662 = vadd.f32 %v518, %v661
  %v663 = vpop.f32.mrf.mxu0
  %664 = vmatprep.mubr.bf16.mxu0 %v454
  %665 = vmatmul.mubr.bf16.gmra.mxu0 %v453
  %v666 = vpop.f32.mrf.mxu0
  %v667 = vadd.f32 %v518, %v666
  %v668 = vpop.f32.mrf.mxu0
  %v669 = vpop.f32.mrf.mxu0
  %v670 = vadd.f32 %v518, %v669
  %v671 = vpop.f32.mrf.mxu0
  %672 = vmatprep.mubr.bf16.mxu0 %v456
  %673 = vmatmul.mubr.bf16.gmra.mxu0 %v455
  %v674 = vpop.f32.mrf.mxu0
  %v675 = vadd.f32 %v518, %v674
  %v676 = vpop.f32.mrf.mxu0
  %v677 = vpop.f32.mrf.mxu0
  %v678 = vadd.f32 %v518, %v677
  %v679 = vpop.f32.mrf.mxu0
  %680 = vmatprep.mubr.bf16.mxu0 %v458
  %681 = vmatmul.mubr.bf16.gmra.mxu0 %v457
  %v682 = vpop.f32.mrf.mxu0
  %v683 = vadd.f32 %v518, %v682
  %v684 = vpop.f32.mrf.mxu0
  %v685 = vpop.f32.mrf.mxu0
  %v686 = vadd.f32 %v518, %v685
  %v687 = vpop.f32.mrf.mxu0
  %688 = vmatprep.mubr.bf16.mxu0 %v460
  %689 = vmatmul.mubr.bf16.gmra.mxu0 %v459
  %v690 = vpop.f32.mrf.mxu0
  %v691 = vadd.f32 %v518, %v690
  %v692 = vpop.f32.mrf.mxu0
  %v693 = vpop.f32.mrf.mxu0
  %v694 = vadd.f32 %v518, %v693
  %v695 = vpop.f32.mrf.mxu0
  %696 = vmatprep.mubr.bf16.mxu0 %v462
  %697 = vmatmul.mubr.bf16.gmra.mxu0 %v461
  %v698 = vpop.f32.mrf.mxu0
  %v699 = vadd.f32 %v518, %v698
  %v700 = vpop.f32.mrf.mxu0
  %v701 = vpop.f32.mrf.mxu0
  %v702 = vadd.f32 %v518, %v701
  %v703 = vpop.f32.mrf.mxu0
  %704 = vmatprep.mubr.bf16.mxu0 %v464
  %705 = vmatmul.mubr.bf16.gmra.mxu0 %v463
  %v706 = vpop.f32.mrf.mxu0
  %v707 = vadd.f32 %v518, %v706
  %v708 = vpop.f32.mrf.mxu0
  %v709 = vpop.f32.mrf.mxu0
  %v710 = vadd.f32 %v518, %v709
  %v711 = vpop.f32.mrf.mxu0
  %712 = vmatprep.mubr.bf16.mxu0 %v466
  %713 = vmatmul.mubr.bf16.gmra.mxu0 %v465
  %v714 = vpop.f32.mrf.mxu0
  %v715 = vadd.f32 %v518, %v714
  %v716 = vpop.f32.mrf.mxu0
  %v717 = vpop.f32.mrf.mxu0
  %v718 = vadd.f32 %v518, %v717
  %v719 = vpop.f32.mrf.mxu0
  %720 = vmatprep.mubr.bf16.mxu0 %v468
  %721 = vmatmul.mubr.bf16.gmra.mxu0 %v467
  %v722 = vpop.f32.mrf.mxu0
  %v723 = vadd.f32 %v518, %v722
  %v724 = vpop.f32.mrf.mxu0
  %v725 = vpop.f32.mrf.mxu0
  %v726 = vadd.f32 %v518, %v725
  %v727 = vpop.f32.mrf.mxu0
  %728 = vmatprep.mubr.bf16.mxu0 %v470
  %729 = vmatmul.mubr.bf16.gmra.mxu0 %v469
  %v730 = vpop.f32.mrf.mxu0
  %v731 = vadd.f32 %v518, %v730
  %v732 = vpop.f32.mrf.mxu0
  %v733 = vpop.f32.mrf.mxu0
  %v734 = vadd.f32 %v518, %v733
  %v735 = vpop.f32.mrf.mxu0
  %736 = vmatprep.mubr.bf16.mxu0 %v472
  %737 = vmatmul.mubr.bf16.gmra.mxu0 %v471
  %v738 = vpop.f32.mrf.mxu0
  %v739 = vadd.f32 %v518, %v738
  %v740 = vpop.f32.mrf.mxu0
  %v741 = vpop.f32.mrf.mxu0
  %v742 = vadd.f32 %v518, %v741
  %v743 = vpop.f32.mrf.mxu0
  %744 = vmatprep.mubr.bf16.mxu0 %v474
  %745 = vmatmul.mubr.bf16.gmra.mxu0 %v473
  %v746 = vpop.f32.mrf.mxu0
  %v747 = vadd.f32 %v518, %v746
  %v748 = vpop.f32.mrf.mxu0
  %v749 = vpop.f32.mrf.mxu0
  %v750 = vadd.f32 %v518, %v749
  %v751 = vpop.f32.mrf.mxu0
  %752 = vmatprep.mubr.bf16.mxu0 %v476
  %753 = vmatmul.mubr.bf16.gmra.mxu0 %v475
  %v754 = vpop.f32.mrf.mxu0
  %v755 = vadd.f32 %v518, %v754
  %v756 = vpop.f32.mrf.mxu0
  %v757 = vpop.f32.mrf.mxu0
  %v758 = vadd.f32 %v518, %v757
  %v759 = vpop.f32.mrf.mxu0
  %760 = vmatprep.mubr.bf16.mxu0 %v478
  %761 = vmatmul.mubr.bf16.gmra.mxu0 %v477
  %v762 = vpop.f32.mrf.mxu0
  %v763 = vadd.f32 %v518, %v762
  %v764 = vpop.f32.mrf.mxu0
  %v765 = vpop.f32.mrf.mxu0
  %v766 = vadd.f32 %v518, %v765
  %v767 = vpop.f32.mrf.mxu0
  %768 = vmatprep.mubr.bf16.mxu0 %v480
  %769 = vmatmul.mubr.bf16.gmra.mxu0 %v479
  %v770 = vpop.f32.mrf.mxu0
  %v771 = vadd.f32 %v518, %v770
  %v772 = vpop.f32.mrf.mxu0
  %v773 = vpop.f32.mrf.mxu0
  %v774 = vadd.f32 %v518, %v773
  %v775 = vpop.f32.mrf.mxu0
  %776 = vdwg.mxu0
  %v777 = vmax.f32 %v651, 0.0
  %v778 = vmax.f32 %v654, 0.0
  %v779 = vmax.f32 %v659, 0.0
  %v780 = vmax.f32 %v662, 0.0
  %v781 = vmax.f32 %v667, 0.0
  %v782 = vmax.f32 %v670, 0.0
  %v783 = vmax.f32 %v675, 0.0
  %v784 = vmax.f32 %v678, 0.0
  %v785 = vmax.f32 %v683, 0.0
  %v786 = vmax.f32 %v686, 0.0
  %v787 = vmax.f32 %v691, 0.0
  %v788 = vmax.f32 %v694, 0.0
  %v789 = vmax.f32 %v699, 0.0
  %v790 = vmax.f32 %v702, 0.0
  %v791 = vmax.f32 %v707, 0.0
  %v792 = vmax.f32 %v710, 0.0
  %v793 = vmax.f32 %v715, 0.0
  %v794 = vmax.f32 %v718, 0.0
  %v795 = vmax.f32 %v723, 0.0
  %v796 = vmax.f32 %v726, 0.0
  %v797 = vmax.f32 %v731, 0.0
  %v798 = vmax.f32 %v734, 0.0
  %v799 = vmax.f32 %v739, 0.0
  %v800 = vmax.f32 %v742, 0.0
  %v801 = vmax.f32 %v747, 0.0
  %v802 = vmax.f32 %v750, 0.0
  %v803 = vmax.f32 %v755, 0.0
  %v804 = vmax.f32 %v758, 0.0
  %v805 = vmax.f32 %v763, 0.0
  %v806 = vmax.f32 %v766, 0.0
  %v807 = vmax.f32 %v771, 0.0
  %v808 = vmax.f32 %v774, 0.0
  %v809 = vpack.c.bf16 %v778, %v777
  %v810 = vpack.c.bf16 %v780, %v779
  %v811 = vpack.c.bf16 %v782, %v781
  %v812 = vpack.c.bf16 %v784, %v783
  %v813 = vpack.c.bf16 %v786, %v785
  %v814 = vpack.c.bf16 %v788, %v787
  %v815 = vpack.c.bf16 %v790, %v789
  %v816 = vpack.c.bf16 %v792, %v791
  %v817 = vpack.c.bf16 %v794, %v793
  %v818 = vpack.c.bf16 %v796, %v795
  %v819 = vpack.c.bf16 %v798, %v797
  %v820 = vpack.c.bf16 %v800, %v799
  %v821 = vpack.c.bf16 %v802, %v801
  %v822 = vpack.c.bf16 %v804, %v803
  %v823 = vpack.c.bf16 %v806, %v805
  %v824 = vpack.c.bf16 %v808, %v807
  %v825 = vld [vmem:[%s5] sm:$0xf]
  %v826 = vld [vmem:[%s5 + $0x4] sm:$0xf]
  %v827 = vld [vmem:[%s5 + $0x8] sm:$0xf]
  %v828 = vld [vmem:[%s5 + $0xc] sm:$0xf]
  %v829 = vld [vmem:[%s5 + $0x10] sm:$0xf]
  %v830 = vld [vmem:[%s5 + $0x14] sm:$0xf]
  %v831 = vld [vmem:[%s5 + $0x18] sm:$0xf]
  %v832 = vld [vmem:[%s5 + $0x1c] sm:$0xf]
  %v833 = vld [vmem:[%s5 + $0x20] sm:$0xf]
  %v834 = vld [vmem:[%s5 + $0x24] sm:$0xf]
  %v835 = vld [vmem:[%s5 + $0x28] sm:$0xf]
  %v836 = vld [vmem:[%s5 + $0x2c] sm:$0xf]
  %v837 = vld [vmem:[%s5 + $0x30] sm:$0xf]
  %v838 = vld [vmem:[%s5 + $0x34] sm:$0xf]
  %v839 = vld [vmem:[%s5 + $0x38] sm:$0xf]
  %v840 = vld [vmem:[%s5 + $0x3c] sm:$0xf]
  %v841 = vld [vmem:[%s6] sm:$0x1]
  %v843 = vlaneseq
  %v844 = vshrl.u32 %v843, 7
  %v845 = vsub.s32 0, %v844
  %v846 = vrot.slane %v841, %v845
  %v864 = vunpack.c.l.b16 %v825
  %v865 = vunpack.c.l.b16 %v826
  %v866 = vunpack.c.l.b16 %v827
  %v867 = vunpack.c.l.b16 %v828
  %v868 = vunpack.c.l.b16 %v829
  %v869 = vunpack.c.l.b16 %v830
  %v870 = vunpack.c.l.b16 %v831
  %v871 = vunpack.c.l.b16 %v832
  %v872 = vunpack.c.l.b16 %v833
  %v873 = vunpack.c.l.b16 %v834
  %v874 = vunpack.c.l.b16 %v835
  %v875 = vunpack.c.l.b16 %v836
  %v876 = vunpack.c.l.b16 %v837
  %v877 = vunpack.c.l.b16 %v838
  %v878 = vunpack.c.l.b16 %v839
  %v879 = vunpack.c.l.b16 %v840
  %v880 = vpack.c.b16 %v865, %v864
  %v881 = vpack.c.b16 %v867, %v866
  %v882 = vpack.c.b16 %v869, %v868
  %v883 = vpack.c.b16 %v871, %v870
  %v884 = vpack.c.b16 %v873, %v872
  %v885 = vpack.c.b16 %v875, %v874
  %v886 = vpack.c.b16 %v877, %v876
  %v887 = vpack.c.b16 %v879, %v878
  %896 = vmatprep.subr.bf16.mxu0 0
  %897 = vmatpush1.bf16.msra.mxu0 %v887
  %898 = vmatprep.subr.bf16.mxu0 0
  %899 = vmatpush1.bf16.msra.mxu0 %v886
  %900 = vmatprep.subr.bf16.mxu0 0
  %901 = vmatpush1.bf16.msra.mxu0 %v885
  %902 = vmatprep.subr.bf16.mxu0 0
  %903 = vmatpush1.bf16.msra.mxu0 %v884
  %904 = vmatprep.subr.bf16.mxu0 0
  %905 = vmatpush1.bf16.msra.mxu0 %v883
  %906 = vmatprep.subr.bf16.mxu0 0
  %907 = vmatpush1.bf16.msra.mxu0 %v882
  %908 = vmatprep.subr.bf16.mxu0 0
  %909 = vmatpush1.bf16.msra.mxu0 %v881
  %910 = vmatprep.subr.bf16.mxu0 0
  %911 = vmatpush1.bf16.msra.mxu0 %v880
  %912 = vmatprep.subr.bf16.mxu0 0
  %913 = vmatpush2.bf16.msra.mxu0 0
  %914 = vmatprep.subr.bf16.mxu0 0
  %915 = vmatpush2.bf16.msra.mxu0 0
  %916 = vmatprep.subr.bf16.mxu0 0
  %917 = vmatpush2.bf16.msra.mxu0 0
  %918 = vmatprep.subr.bf16.mxu0 0
  %919 = vmatpush2.bf16.msra.mxu0 0
  %920 = vmatprep.subr.bf16.mxu0 0
  %921 = vmatpush2.bf16.msra.mxu0 0
  %922 = vmatprep.subr.bf16.mxu0 0
  %923 = vmatpush2.bf16.msra.mxu0 0
  %924 = vmatprep.subr.bf16.mxu0 0
  %925 = vmatpush2.bf16.msra.mxu0 0
  %926 = vmatprep.subr.bf16.mxu0 0
  %927 = vmatpush2.bf16.msra.mxu0 0
  %928 = vmatprep.mubr.bf16.mxu0 0
  %929 = vmatmul.mubr.bf16.gmra.mxu0 %v809
  %v930 = vpop.f32.mrf.mxu0
  %v931 = vadd.f32 %v846, %v930
  %v932 = vpop.f32.mrf.mxu0
  %v933 = vpop.f32.mrf.mxu0
  %v934 = vadd.f32 %v846, %v933
  %v935 = vpop.f32.mrf.mxu0
  %936 = vmatprep.mubr.bf16.mxu0 0
  %937 = vmatmul.mubr.bf16.gmra.mxu0 %v810
  %v938 = vpop.f32.mrf.mxu0
  %v939 = vadd.f32 %v846, %v938
  %v940 = vpop.f32.mrf.mxu0
  %v941 = vpop.f32.mrf.mxu0
  %v942 = vadd.f32 %v846, %v941
  %v943 = vpop.f32.mrf.mxu0
  %944 = vmatprep.mubr.bf16.mxu0 0
  %945 = vmatmul.mubr.bf16.gmra.mxu0 %v811
  %v946 = vpop.f32.mrf.mxu0
  %v947 = vadd.f32 %v846, %v946
  %v948 = vpop.f32.mrf.mxu0
  %v949 = vpop.f32.mrf.mxu0
  %v950 = vadd.f32 %v846, %v949
  %v951 = vpop.f32.mrf.mxu0
  %952 = vmatprep.mubr.bf16.mxu0 0
  %953 = vmatmul.mubr.bf16.gmra.mxu0 %v812
  %v954 = vpop.f32.mrf.mxu0
  %v955 = vadd.f32 %v846, %v954
  %v956 = vpop.f32.mrf.mxu0
  %v957 = vpop.f32.mrf.mxu0
  %v958 = vadd.f32 %v846, %v957
  %v959 = vpop.f32.mrf.mxu0
  %960 = vmatprep.mubr.bf16.mxu0 0
  %961 = vmatmul.mubr.bf16.gmra.mxu0 %v813
  %v962 = vpop.f32.mrf.mxu0
  %v963 = vadd.f32 %v846, %v962
  %v964 = vpop.f32.mrf.mxu0
  %v965 = vpop.f32.mrf.mxu0
  %v966 = vadd.f32 %v846, %v965
  %v967 = vpop.f32.mrf.mxu0
  %968 = vmatprep.mubr.bf16.mxu0 0
  %969 = vmatmul.mubr.bf16.gmra.mxu0 %v814
  %v970 = vpop.f32.mrf.mxu0
  %v971 = vadd.f32 %v846, %v970
  %v972 = vpop.f32.mrf.mxu0
  %v973 = vpop.f32.mrf.mxu0
  %v974 = vadd.f32 %v846, %v973
  %v975 = vpop.f32.mrf.mxu0
  %976 = vmatprep.mubr.bf16.mxu0 0
  %977 = vmatmul.mubr.bf16.gmra.mxu0 %v815
  %v978 = vpop.f32.mrf.mxu0
  %v979 = vadd.f32 %v846, %v978
  %v980 = vpop.f32.mrf.mxu0
  %v981 = vpop.f32.mrf.mxu0
  %v982 = vadd.f32 %v846, %v981
  %v983 = vpop.f32.mrf.mxu0
  %984 = vmatprep.mubr.bf16.mxu0 0
  %985 = vmatmul.mubr.bf16.gmra.mxu0 %v816
  %v986 = vpop.f32.mrf.mxu0
  %v987 = vadd.f32 %v846, %v986
  %v988 = vpop.f32.mrf.mxu0
  %v989 = vpop.f32.mrf.mxu0
  %v990 = vadd.f32 %v846, %v989
  %v991 = vpop.f32.mrf.mxu0
  %992 = vmatprep.mubr.bf16.mxu0 0
  %993 = vmatmul.mubr.bf16.gmra.mxu0 %v817
  %v994 = vpop.f32.mrf.mxu0
  %v995 = vadd.f32 %v846, %v994
  %v996 = vpop.f32.mrf.mxu0
  %v997 = vpop.f32.mrf.mxu0
  %v998 = vadd.f32 %v846, %v997
  %v999 = vpop.f32.mrf.mxu0
  %1000 = vmatprep.mubr.bf16.mxu0 0
  %1001 = vmatmul.mubr.bf16.gmra.mxu0 %v818
  %v1002 = vpop.f32.mrf.mxu0
  %v1003 = vadd.f32 %v846, %v1002
  %v1004 = vpop.f32.mrf.mxu0
  %v1005 = vpop.f32.mrf.mxu0
  %v1006 = vadd.f32 %v846, %v1005
  %v1007 = vpop.f32.mrf.mxu0
  %1008 = vmatprep.mubr.bf16.mxu0 0
  %1009 = vmatmul.mubr.bf16.gmra.mxu0 %v819
  %v1010 = vpop.f32.mrf.mxu0
  %v1011 = vadd.f32 %v846, %v1010
  %v1012 = vpop.f32.mrf.mxu0
  %v1013 = vpop.f32.mrf.mxu0
  %v1014 = vadd.f32 %v846, %v1013
  %v1015 = vpop.f32.mrf.mxu0
  %1016 = vmatprep.mubr.bf16.mxu0 0
  %1017 = vmatmul.mubr.bf16.gmra.mxu0 %v820
  %v1018 = vpop.f32.mrf.mxu0
  %v1019 = vadd.f32 %v846, %v1018
  %v1020 = vpop.f32.mrf.mxu0
  %v1021 = vpop.f32.mrf.mxu0
  %v1022 = vadd.f32 %v846, %v1021
  %v1023 = vpop.f32.mrf.mxu0
  %1024 = vmatprep.mubr.bf16.mxu0 0
  %1025 = vmatmul.mubr.bf16.gmra.mxu0 %v821
  %v1026 = vpop.f32.mrf.mxu0
  %v1027 = vadd.f32 %v846, %v1026
  %v1028 = vpop.f32.mrf.mxu0
  %v1029 = vpop.f32.mrf.mxu0
  %v1030 = vadd.f32 %v846, %v1029
  %v1031 = vpop.f32.mrf.mxu0
  %1032 = vmatprep.mubr.bf16.mxu0 0
  %1033 = vmatmul.mubr.bf16.gmra.mxu0 %v822
  %v1034 = vpop.f32.mrf.mxu0
  %v1035 = vadd.f32 %v846, %v1034
  %v1036 = vpop.f32.mrf.mxu0
  %v1037 = vpop.f32.mrf.mxu0
  %v1038 = vadd.f32 %v846, %v1037
  %v1039 = vpop.f32.mrf.mxu0
  %1040 = vmatprep.mubr.bf16.mxu0 0
  %1041 = vmatmul.mubr.bf16.gmra.mxu0 %v823
  %v1042 = vpop.f32.mrf.mxu0
  %v1043 = vadd.f32 %v846, %v1042
  %v1044 = vpop.f32.mrf.mxu0
  %v1045 = vpop.f32.mrf.mxu0
  %v1046 = vadd.f32 %v846, %v1045
  %v1047 = vpop.f32.mrf.mxu0
  %1048 = vmatprep.mubr.bf16.mxu0 0
  %1049 = vmatmul.mubr.bf16.gmra.mxu0 %v824
  %v1050 = vpop.f32.mrf.mxu0
  %v1051 = vadd.f32 %v846, %v1050
  %v1052 = vpop.f32.mrf.mxu0
  %v1053 = vpop.f32.mrf.mxu0
  %v1054 = vadd.f32 %v846, %v1053
  %v1055 = vpop.f32.mrf.mxu0
  %1056 = vdwg.mxu0
  %v1057 = vmax.f32 %v931, 0.0
  %v1058 = vmax.f32 %v934, 0.0
  %v1059 = vmax.f32 %v939, 0.0
  %v1060 = vmax.f32 %v942, 0.0
  %v1061 = vmax.f32 %v947, 0.0
  %v1062 = vmax.f32 %v950, 0.0
  %v1063 = vmax.f32 %v955, 0.0
  %v1064 = vmax.f32 %v958, 0.0
  %v1065 = vmax.f32 %v963, 0.0
  %v1066 = vmax.f32 %v966, 0.0
  %v1067 = vmax.f32 %v971, 0.0
  %v1068 = vmax.f32 %v974, 0.0
  %v1069 = vmax.f32 %v979, 0.0
  %v1070 = vmax.f32 %v982, 0.0
  %v1071 = vmax.f32 %v987, 0.0
  %v1072 = vmax.f32 %v990, 0.0
  %v1073 = vmax.f32 %v995, 0.0
  %v1074 = vmax.f32 %v998, 0.0
  %v1075 = vmax.f32 %v1003, 0.0
  %v1076 = vmax.f32 %v1006, 0.0
  %v1077 = vmax.f32 %v1011, 0.0
  %v1078 = vmax.f32 %v1014, 0.0
  %v1079 = vmax.f32 %v1019, 0.0
  %v1080 = vmax.f32 %v1022, 0.0
  %v1081 = vmax.f32 %v1027, 0.0
  %v1082 = vmax.f32 %v1030, 0.0
  %v1083 = vmax.f32 %v1035, 0.0
  %v1084 = vmax.f32 %v1038, 0.0
  %v1085 = vmax.f32 %v1043, 0.0
  %v1086 = vmax.f32 %v1046, 0.0
  %v1087 = vmax.f32 %v1051, 0.0
  %v1088 = vmax.f32 %v1054, 0.0
  %v1089 = vpack.c.bf16 %v1058, %v1057
  %v1090 = vpack.c.bf16 %v1060, %v1059
  %v1091 = vpack.c.bf16 %v1062, %v1061
  %v1092 = vpack.c.bf16 %v1064, %v1063
  %v1093 = vpack.c.bf16 %v1066, %v1065
  %v1094 = vpack.c.bf16 %v1068, %v1067
  %v1095 = vpack.c.bf16 %v1070, %v1069
  %v1096 = vpack.c.bf16 %v1072, %v1071
  %v1097 = vpack.c.bf16 %v1074, %v1073
  %v1098 = vpack.c.bf16 %v1076, %v1075
  %v1099 = vpack.c.bf16 %v1078, %v1077
  %v1100 = vpack.c.bf16 %v1080, %v1079
  %v1101 = vpack.c.bf16 %v1082, %v1081
  %v1102 = vpack.c.bf16 %v1084, %v1083
  %v1103 = vpack.c.bf16 %v1086, %v1085
  %v1104 = vpack.c.bf16 %v1088, %v1087
  %v1105 = vld [vmem:[%s7] sm:$0xf]
  %v1106 = vld [vmem:[%s7 + $0x4] sm:$0xf]
  %v1107 = vld [vmem:[%s7 + $0x8] sm:$0xf]
  %v1108 = vld [vmem:[%s7 + $0xc] sm:$0xf]
  %v1109 = vld [vmem:[%s7 + $0x10] sm:$0xf]
  %v1110 = vld [vmem:[%s7 + $0x14] sm:$0xf]
  %v1111 = vld [vmem:[%s7 + $0x18] sm:$0xf]
  %v1112 = vld [vmem:[%s7 + $0x1c] sm:$0xf]
  %v1113 = vld [vmem:[%s8] sm:$0x1]
  %v1115 = vlaneseq
  %v1116 = vshrl.u32 %v1115, 7
  %v1117 = vsub.s32 0, %v1116
  %v1118 = vrot.slane %v1113, %v1117
  %v1128 = vunpack.c.l.b16 %v1105
  %v1129 = vunpack.c.l.b16 %v1106
  %v1130 = vunpack.c.l.b16 %v1107
  %v1131 = vunpack.c.l.b16 %v1108
  %v1132 = vunpack.c.l.b16 %v1109
  %v1133 = vunpack.c.l.b16 %v1110
  %v1134 = vunpack.c.l.b16 %v1111
  %v1135 = vunpack.c.l.b16 %v1112
  %v1136 = vpack.c.b16 %v1129, %v1128
  %v1137 = vpack.c.b16 %v1131, %v1130
  %v1138 = vpack.c.b16 %v1133, %v1132
  %v1139 = vpack.c.b16 %v1135, %v1134
  %vm1144 = vcmask 523264
  %v1146 = vsel %vm1144, %v1089, 0
  %v1149 = vsel %vm1144, %v1090, 0
  %v1152 = vsel %vm1144, %v1091, 0
  %v1155 = vsel %vm1144, %v1092, 0
  %v1158 = vsel %vm1144, %v1093, 0
  %v1161 = vsel %vm1144, %v1094, 0
  %v1164 = vsel %vm1144, %v1095, 0
  %v1167 = vsel %vm1144, %v1096, 0
  %v1170 = vsel %vm1144, %v1097, 0
  %v1173 = vsel %vm1144, %v1098, 0
  %v1176 = vsel %vm1144, %v1099, 0
  %v1179 = vsel %vm1144, %v1100, 0
  %v1182 = vsel %vm1144, %v1101, 0
  %v1185 = vsel %vm1144, %v1102, 0
  %v1188 = vsel %vm1144, %v1103, 0
  %v1191 = vsel %vm1144, %v1104, 0
  %1193 = vmatprep.subr.bf16.mxu0 0
  %1194 = vmatpush1.bf16.msra.mxu0 0
  %1195 = vmatprep.subr.bf16.mxu0 0
  %1196 = vmatpush1.bf16.msra.mxu0 0
  %1197 = vmatprep.subr.bf16.mxu0 0
  %1198 = vmatpush1.bf16.msra.mxu0 0
  %1199 = vmatprep.subr.bf16.mxu0 0
  %1200 = vmatpush1.bf16.msra.mxu0 0
  %1201 = vmatprep.subr.bf16.mxu0 0
  %1202 = vmatpush1.bf16.msra.mxu0 %v1139
  %1203 = vmatprep.subr.bf16.mxu0 0
  %1204 = vmatpush1.bf16.msra.mxu0 %v1138
  %1205 = vmatprep.subr.bf16.mxu0 0
  %1206 = vmatpush1.bf16.msra.mxu0 %v1137
  %1207 = vmatprep.subr.bf16.mxu0 0
  %1208 = vmatpush1.bf16.msra.mxu0 %v1136
  %1209 = vmatprep.subr.bf16.mxu0 0
  %1210 = vmatpush2.bf16.msra.mxu0 0
  %1211 = vmatprep.subr.bf16.mxu0 0
  %1212 = vmatpush2.bf16.msra.mxu0 0
  %1213 = vmatprep.subr.bf16.mxu0 0
  %1214 = vmatpush2.bf16.msra.mxu0 0
  %1215 = vmatprep.subr.bf16.mxu0 0
  %1216 = vmatpush2.bf16.msra.mxu0 0
  %1217 = vmatprep.subr.bf16.mxu0 0
  %1218 = vmatpush2.bf16.msra.mxu0 0
  %1219 = vmatprep.subr.bf16.mxu0 0
  %1220 = vmatpush2.bf16.msra.mxu0 0
  %1221 = vmatprep.subr.bf16.mxu0 0
  %1222 = vmatpush2.bf16.msra.mxu0 0
  %1223 = vmatprep.subr.bf16.mxu0 0
  %1224 = vmatpush2.bf16.msra.mxu0 0
  %1225 = vmatprep.mubr.bf16.mxu0 0
  %1226 = vmatmul.mubr.bf16.gmra.mxu0 %v1146
  %v1227 = vpop.f32.mrf.mxu0
  %v1228 = vadd.f32 %v1118, %v1227
  %v1229 = vpop.f32.mrf.mxu0
  %v1230 = vpop.f32.mrf.mxu0
  %v1231 = vadd.f32 %v1118, %v1230
  %v1232 = vpop.f32.mrf.mxu0
  %1233 = vmatprep.mubr.bf16.mxu0 0
  %1234 = vmatmul.mubr.bf16.gmra.mxu0 %v1149
  %v1235 = vpop.f32.mrf.mxu0
  %v1236 = vadd.f32 %v1118, %v1235
  %v1237 = vpop.f32.mrf.mxu0
  %v1238 = vpop.f32.mrf.mxu0
  %v1239 = vadd.f32 %v1118, %v1238
  %v1240 = vpop.f32.mrf.mxu0
  %1241 = vmatprep.mubr.bf16.mxu0 0
  %1242 = vmatmul.mubr.bf16.gmra.mxu0 %v1152
  %v1243 = vpop.f32.mrf.mxu0
  %v1244 = vadd.f32 %v1118, %v1243
  %v1245 = vpop.f32.mrf.mxu0
  %v1246 = vpop.f32.mrf.mxu0
  %v1247 = vadd.f32 %v1118, %v1246
  %v1248 = vpop.f32.mrf.mxu0
  %1249 = vmatprep.mubr.bf16.mxu0 0
  %1250 = vmatmul.mubr.bf16.gmra.mxu0 %v1155
  %v1251 = vpop.f32.mrf.mxu0
  %v1252 = vadd.f32 %v1118, %v1251
  %v1253 = vpop.f32.mrf.mxu0
  %v1254 = vpop.f32.mrf.mxu0
  %v1255 = vadd.f32 %v1118, %v1254
  %v1256 = vpop.f32.mrf.mxu0
  %1257 = vmatprep.mubr.bf16.mxu0 0
  %1258 = vmatmul.mubr.bf16.gmra.mxu0 %v1158
  %v1259 = vpop.f32.mrf.mxu0
  %v1260 = vadd.f32 %v1118, %v1259
  %v1261 = vpop.f32.mrf.mxu0
  %v1262 = vpop.f32.mrf.mxu0
  %v1263 = vadd.f32 %v1118, %v1262
  %v1264 = vpop.f32.mrf.mxu0
  %1265 = vmatprep.mubr.bf16.mxu0 0
  %1266 = vmatmul.mubr.bf16.gmra.mxu0 %v1161
  %v1267 = vpop.f32.mrf.mxu0
  %v1268 = vadd.f32 %v1118, %v1267
  %v1269 = vpop.f32.mrf.mxu0
  %v1270 = vpop.f32.mrf.mxu0
  %v1271 = vadd.f32 %v1118, %v1270
  %v1272 = vpop.f32.mrf.mxu0
  %1273 = vmatprep.mubr.bf16.mxu0 0
  %1274 = vmatmul.mubr.bf16.gmra.mxu0 %v1164
  %v1275 = vpop.f32.mrf.mxu0
  %v1276 = vadd.f32 %v1118, %v1275
  %v1277 = vpop.f32.mrf.mxu0
  %v1278 = vpop.f32.mrf.mxu0
  %v1279 = vadd.f32 %v1118, %v1278
  %v1280 = vpop.f32.mrf.mxu0
  %1281 = vmatprep.mubr.bf16.mxu0 0
  %1282 = vmatmul.mubr.bf16.gmra.mxu0 %v1167
  %v1283 = vpop.f32.mrf.mxu0
  %v1284 = vadd.f32 %v1118, %v1283
  %v1285 = vpop.f32.mrf.mxu0
  %v1286 = vpop.f32.mrf.mxu0
  %v1287 = vadd.f32 %v1118, %v1286
  %v1288 = vpop.f32.mrf.mxu0
  %1289 = vmatprep.mubr.bf16.mxu0 0
  %1290 = vmatmul.mubr.bf16.gmra.mxu0 %v1170
  %v1291 = vpop.f32.mrf.mxu0
  %v1292 = vadd.f32 %v1118, %v1291
  %v1293 = vpop.f32.mrf.mxu0
  %v1294 = vpop.f32.mrf.mxu0
  %v1295 = vadd.f32 %v1118, %v1294
  %v1296 = vpop.f32.mrf.mxu0
  %1297 = vmatprep.mubr.bf16.mxu0 0
  %1298 = vmatmul.mubr.bf16.gmra.mxu0 %v1173
  %v1299 = vpop.f32.mrf.mxu0
  %v1300 = vadd.f32 %v1118, %v1299
  %v1301 = vpop.f32.mrf.mxu0
  %v1302 = vpop.f32.mrf.mxu0
  %v1303 = vadd.f32 %v1118, %v1302
  %v1304 = vpop.f32.mrf.mxu0
  %1305 = vmatprep.mubr.bf16.mxu0 0
  %1306 = vmatmul.mubr.bf16.gmra.mxu0 %v1176
  %v1307 = vpop.f32.mrf.mxu0
  %v1308 = vadd.f32 %v1118, %v1307
  %v1309 = vpop.f32.mrf.mxu0
  %v1310 = vpop.f32.mrf.mxu0
  %v1311 = vadd.f32 %v1118, %v1310
  %v1312 = vpop.f32.mrf.mxu0
  %1313 = vmatprep.mubr.bf16.mxu0 0
  %1314 = vmatmul.mubr.bf16.gmra.mxu0 %v1179
  %v1315 = vpop.f32.mrf.mxu0
  %v1316 = vadd.f32 %v1118, %v1315
  %v1317 = vpop.f32.mrf.mxu0
  %v1318 = vpop.f32.mrf.mxu0
  %v1319 = vadd.f32 %v1118, %v1318
  %v1320 = vpop.f32.mrf.mxu0
  %1321 = vmatprep.mubr.bf16.mxu0 0
  %1322 = vmatmul.mubr.bf16.gmra.mxu0 %v1182
  %v1323 = vpop.f32.mrf.mxu0
  %v1324 = vadd.f32 %v1118, %v1323
  %v1325 = vpop.f32.mrf.mxu0
  %v1326 = vpop.f32.mrf.mxu0
  %v1327 = vadd.f32 %v1118, %v1326
  %v1328 = vpop.f32.mrf.mxu0
  %1329 = vmatprep.mubr.bf16.mxu0 0
  %1330 = vmatmul.mubr.bf16.gmra.mxu0 %v1185
  %v1331 = vpop.f32.mrf.mxu0
  %v1332 = vadd.f32 %v1118, %v1331
  %v1333 = vpop.f32.mrf.mxu0
  %v1334 = vpop.f32.mrf.mxu0
  %v1335 = vadd.f32 %v1118, %v1334
  %v1336 = vpop.f32.mrf.mxu0
  %1337 = vmatprep.mubr.bf16.mxu0 0
  %1338 = vmatmul.mubr.bf16.gmra.mxu0 %v1188
  %v1339 = vpop.f32.mrf.mxu0
  %v1340 = vadd.f32 %v1118, %v1339
  %v1341 = vpop.f32.mrf.mxu0
  %v1342 = vpop.f32.mrf.mxu0
  %v1343 = vadd.f32 %v1118, %v1342
  %v1344 = vpop.f32.mrf.mxu0
  %1345 = vmatprep.mubr.bf16.mxu0 0
  %1346 = vmatmul.mubr.bf16.gmra.mxu0 %v1191
  %v1347 = vpop.f32.mrf.mxu0
  %v1348 = vadd.f32 %v1118, %v1347
  %v1349 = vpop.f32.mrf.mxu0
  %v1350 = vpop.f32.mrf.mxu0
  %v1351 = vadd.f32 %v1118, %v1350
  %v1352 = vpop.f32.mrf.mxu0
  %1353 = vdwg.mxu0
  %vm1354 = vcmask 72704
  %1355 = vst.msk [vmem:[%s18] sm:$0xff] %vm1354, %v1228
  %1356 = vst.msk [vmem:[%s18 + $0x8] sm:$0xff] %vm1354, %v1231
  %1357 = vst.msk [vmem:[%s18 + $0x10] sm:$0xff] %vm1354, %v1236
  %1358 = vst.msk [vmem:[%s18 + $0x18] sm:$0xff] %vm1354, %v1239
  %1359 = vst.msk [vmem:[%s18 + $0x20] sm:$0xff] %vm1354, %v1244
  %1360 = vst.msk [vmem:[%s18 + $0x28] sm:$0xff] %vm1354, %v1247
  %1361 = vst.msk [vmem:[%s18 + $0x30] sm:$0xff] %vm1354, %v1252
  %1362 = vst.msk [vmem:[%s18 + $0x38] sm:$0xff] %vm1354, %v1255
  %1363 = vst.msk [vmem:[%s18 + $0x40] sm:$0xff] %vm1354, %v1260
  %1364 = vst.msk [vmem:[%s18 + $0x48] sm:$0xff] %vm1354, %v1263
  %1365 = vst.msk [vmem:[%s18 + $0x50] sm:$0xff] %vm1354, %v1268
  %1366 = vst.msk [vmem:[%s18 + $0x58] sm:$0xff] %vm1354, %v1271
  %1367 = vst.msk [vmem:[%s18 + $0x60] sm:$0xff] %vm1354, %v1276
  %1368 = vst.msk [vmem:[%s18 + $0x68] sm:$0xff] %vm1354, %v1279
  %1369 = vst.msk [vmem:[%s18 + $0x70] sm:$0xff] %vm1354, %v1284
  %1370 = vst.msk [vmem:[%s18 + $0x78] sm:$0xff] %vm1354, %v1287
  %1371 = vst.msk [vmem:[%s18 + $0x80] sm:$0xff] %vm1354, %v1292
  %1372 = vst.msk [vmem:[%s18 + $0x88] sm:$0xff] %vm1354, %v1295
  %1373 = vst.msk [vmem:[%s18 + $0x90] sm:$0xff] %vm1354, %v1300
  %1374 = vst.msk [vmem:[%s18 + $0x98] sm:$0xff] %vm1354, %v1303
  %1375 = vst.msk [vmem:[%s18 + $0xa0] sm:$0xff] %vm1354, %v1308
  %1376 = vst.msk [vmem:[%s18 + $0xa8] sm:$0xff] %vm1354, %v1311
  %1377 = vst.msk [vmem:[%s18 + $0xb0] sm:$0xff] %vm1354, %v1316
  %1378 = vst.msk [vmem:[%s18 + $0xb8] sm:$0xff] %vm1354, %v1319
  %1379 = vst.msk [vmem:[%s18 + $0xc0] sm:$0xff] %vm1354, %v1324
  %1380 = vst.msk [vmem:[%s18 + $0xc8] sm:$0xff] %vm1354, %v1327
  %1381 = vst.msk [vmem:[%s18 + $0xd0] sm:$0xff] %vm1354, %v1332
  %1382 = vst.msk [vmem:[%s18 + $0xd8] sm:$0xff] %vm1354, %v1335
  %1383 = vst.msk [vmem:[%s18 + $0xe0] sm:$0xff] %vm1354, %v1340
  %1384 = vst.msk [vmem:[%s18 + $0xe8] sm:$0xff] %vm1354, %v1343
  %1385 = vst.msk [vmem:[%s18 + $0xf0] sm:$0xff] %vm1354, %v1348
  %1386 = vst.msk [vmem:[%s18 + $0xf8] sm:$0xff] %vm1354, %v1351
  %v1387 = vpack.c.bf16 %v1231, %v1228
  %v1388 = vpack.c.bf16 %v1239, %v1236
  %v1389 = vpack.c.bf16 %v1247, %v1244
  %v1390 = vpack.c.bf16 %v1255, %v1252
  %v1391 = vpack.c.bf16 %v1263, %v1260
  %v1392 = vpack.c.bf16 %v1271, %v1268
  %v1393 = vpack.c.bf16 %v1279, %v1276
  %v1394 = vpack.c.bf16 %v1287, %v1284
  %v1395 = vpack.c.bf16 %v1295, %v1292
  %v1396 = vpack.c.bf16 %v1303, %v1300
  %v1397 = vpack.c.bf16 %v1311, %v1308
  %v1398 = vpack.c.bf16 %v1319, %v1316
  %v1399 = vpack.c.bf16 %v1327, %v1324
  %v1400 = vpack.c.bf16 %v1335, %v1332
  %v1401 = vpack.c.bf16 %v1343, %v1340
  %v1402 = vpack.c.bf16 %v1351, %v1348
  %v1403 = vld [vmem:[%s9] sm:$0xf]
  %v1404 = vld [vmem:[%s9 + $0x4] sm:$0xf]
  %v1405 = vld [vmem:[%s9 + $0x8] sm:$0xf]
  %v1406 = vld [vmem:[%s9 + $0xc] sm:$0xf]
  %v1407 = vld [vmem:[%s9 + $0x10] sm:$0xf]
  %v1408 = vld [vmem:[%s9 + $0x14] sm:$0xf]
  %v1409 = vld [vmem:[%s9 + $0x18] sm:$0xf]
  %v1410 = vld [vmem:[%s9 + $0x1c] sm:$0xf]
  %v1411 = vld [vmem:[%s9 + $0x20] sm:$0xf]
  %v1412 = vld [vmem:[%s9 + $0x24] sm:$0xf]
  %v1413 = vld [vmem:[%s9 + $0x28] sm:$0xf]
  %v1414 = vld [vmem:[%s9 + $0x2c] sm:$0xf]
  %v1415 = vld [vmem:[%s9 + $0x30] sm:$0xf]
  %v1416 = vld [vmem:[%s9 + $0x34] sm:$0xf]
  %v1417 = vld [vmem:[%s9 + $0x38] sm:$0xf]
  %v1418 = vld [vmem:[%s9 + $0x3c] sm:$0xf]
  %v1419 = vld [vmem:[%s10] sm:$0x1]
  %v1421 = vlaneseq
  %v1422 = vshrl.u32 %v1421, 7
  %v1423 = vsub.s32 0, %v1422
  %v1424 = vrot.slane %v1419, %v1423
  %v1442 = vunpack.c.l.b16 %v1403
  %v1443 = vunpack.c.l.b16 %v1404
  %v1444 = vunpack.c.l.b16 %v1405
  %v1445 = vunpack.c.l.b16 %v1406
  %v1446 = vunpack.c.l.b16 %v1407
  %v1447 = vunpack.c.l.b16 %v1408
  %v1448 = vunpack.c.l.b16 %v1409
  %v1449 = vunpack.c.l.b16 %v1410
  %v1450 = vunpack.c.l.b16 %v1411
  %v1451 = vunpack.c.l.b16 %v1412
  %v1452 = vunpack.c.l.b16 %v1413
  %v1453 = vunpack.c.l.b16 %v1414
  %v1454 = vunpack.c.l.b16 %v1415
  %v1455 = vunpack.c.l.b16 %v1416
  %v1456 = vunpack.c.l.b16 %v1417
  %v1457 = vunpack.c.l.b16 %v1418
  %v1458 = vpack.c.b16 %v1443, %v1442
  %v1459 = vpack.c.b16 %v1445, %v1444
  %v1460 = vpack.c.b16 %v1447, %v1446
  %v1461 = vpack.c.b16 %v1449, %v1448
  %v1462 = vpack.c.b16 %v1451, %v1450
  %v1463 = vpack.c.b16 %v1453, %v1452
  %v1464 = vpack.c.b16 %v1455, %v1454
  %v1465 = vpack.c.b16 %v1457, %v1456
  %1474 = vmatprep.subr.bf16.mxu0 0
  %1475 = vmatpush1.bf16.msra.mxu0 %v1465
  %1476 = vmatprep.subr.bf16.mxu0 0
  %1477 = vmatpush1.bf16.msra.mxu0 %v1464
  %1478 = vmatprep.subr.bf16.mxu0 0
  %1479 = vmatpush1.bf16.msra.mxu0 %v1463
  %1480 = vmatprep.subr.bf16.mxu0 0
  %1481 = vmatpush1.bf16.msra.mxu0 %v1462
  %1482 = vmatprep.subr.bf16.mxu0 0
  %1483 = vmatpush1.bf16.msra.mxu0 %v1461
  %1484 = vmatprep.subr.bf16.mxu0 0
  %1485 = vmatpush1.bf16.msra.mxu0 %v1460
  %1486 = vmatprep.subr.bf16.mxu0 0
  %1487 = vmatpush1.bf16.msra.mxu0 %v1459
  %1488 = vmatprep.subr.bf16.mxu0 0
  %1489 = vmatpush1.bf16.msra.mxu0 %v1458
  %1490 = vmatprep.subr.bf16.mxu0 0
  %1491 = vmatpush2.bf16.msra.mxu0 0
  %1492 = vmatprep.subr.bf16.mxu0 0
  %1493 = vmatpush2.bf16.msra.mxu0 0
  %1494 = vmatprep.subr.bf16.mxu0 0
  %1495 = vmatpush2.bf16.msra.mxu0 0
  %1496 = vmatprep.subr.bf16.mxu0 0
  %1497 = vmatpush2.bf16.msra.mxu0 0
  %1498 = vmatprep.subr.bf16.mxu0 0
  %1499 = vmatpush2.bf16.msra.mxu0 0
  %1500 = vmatprep.subr.bf16.mxu0 0
  %1501 = vmatpush2.bf16.msra.mxu0 0
  %1502 = vmatprep.subr.bf16.mxu0 0
  %1503 = vmatpush2.bf16.msra.mxu0 0
  %1504 = vmatprep.subr.bf16.mxu0 0
  %1505 = vmatpush2.bf16.msra.mxu0 0
  %1506 = vmatprep.mubr.bf16.mxu0 0
  %1507 = vmatmul.mubr.bf16.gmra.mxu0 %v1387
  %v1508 = vpop.f32.mrf.mxu0
  %v1509 = vadd.f32 %v1424, %v1508
  %v1510 = vpop.f32.mrf.mxu0
  %v1511 = vpop.f32.mrf.mxu0
  %v1512 = vadd.f32 %v1424, %v1511
  %v1513 = vpop.f32.mrf.mxu0
  %1514 = vmatprep.mubr.bf16.mxu0 0
  %1515 = vmatmul.mubr.bf16.gmra.mxu0 %v1388
  %v1516 = vpop.f32.mrf.mxu0
  %v1517 = vadd.f32 %v1424, %v1516
  %v1518 = vpop.f32.mrf.mxu0
  %v1519 = vpop.f32.mrf.mxu0
  %v1520 = vadd.f32 %v1424, %v1519
  %v1521 = vpop.f32.mrf.mxu0
  %1522 = vmatprep.mubr.bf16.mxu0 0
  %1523 = vmatmul.mubr.bf16.gmra.mxu0 %v1389
  %v1524 = vpop.f32.mrf.mxu0
  %v1525 = vadd.f32 %v1424, %v1524
  %v1526 = vpop.f32.mrf.mxu0
  %v1527 = vpop.f32.mrf.mxu0
  %v1528 = vadd.f32 %v1424, %v1527
  %v1529 = vpop.f32.mrf.mxu0
  %1530 = vmatprep.mubr.bf16.mxu0 0
  %1531 = vmatmul.mubr.bf16.gmra.mxu0 %v1390
  %v1532 = vpop.f32.mrf.mxu0
  %v1533 = vadd.f32 %v1424, %v1532
  %v1534 = vpop.f32.mrf.mxu0
  %v1535 = vpop.f32.mrf.mxu0
  %v1536 = vadd.f32 %v1424, %v1535
  %v1537 = vpop.f32.mrf.mxu0
  %1538 = vmatprep.mubr.bf16.mxu0 0
  %1539 = vmatmul.mubr.bf16.gmra.mxu0 %v1391
  %v1540 = vpop.f32.mrf.mxu0
  %v1541 = vadd.f32 %v1424, %v1540
  %v1542 = vpop.f32.mrf.mxu0
  %v1543 = vpop.f32.mrf.mxu0
  %v1544 = vadd.f32 %v1424, %v1543
  %v1545 = vpop.f32.mrf.mxu0
  %1546 = vmatprep.mubr.bf16.mxu0 0
  %1547 = vmatmul.mubr.bf16.gmra.mxu0 %v1392
  %v1548 = vpop.f32.mrf.mxu0
  %v1549 = vadd.f32 %v1424, %v1548
  %v1550 = vpop.f32.mrf.mxu0
  %v1551 = vpop.f32.mrf.mxu0
  %v1552 = vadd.f32 %v1424, %v1551
  %v1553 = vpop.f32.mrf.mxu0
  %1554 = vmatprep.mubr.bf16.mxu0 0
  %1555 = vmatmul.mubr.bf16.gmra.mxu0 %v1393
  %v1556 = vpop.f32.mrf.mxu0
  %v1557 = vadd.f32 %v1424, %v1556
  %v1558 = vpop.f32.mrf.mxu0
  %v1559 = vpop.f32.mrf.mxu0
  %v1560 = vadd.f32 %v1424, %v1559
  %v1561 = vpop.f32.mrf.mxu0
  %1562 = vmatprep.mubr.bf16.mxu0 0
  %1563 = vmatmul.mubr.bf16.gmra.mxu0 %v1394
  %v1564 = vpop.f32.mrf.mxu0
  %v1565 = vadd.f32 %v1424, %v1564
  %v1566 = vpop.f32.mrf.mxu0
  %v1567 = vpop.f32.mrf.mxu0
  %v1568 = vadd.f32 %v1424, %v1567
  %v1569 = vpop.f32.mrf.mxu0
  %1570 = vmatprep.mubr.bf16.mxu0 0
  %1571 = vmatmul.mubr.bf16.gmra.mxu0 %v1395
  %v1572 = vpop.f32.mrf.mxu0
  %v1573 = vadd.f32 %v1424, %v1572
  %v1574 = vpop.f32.mrf.mxu0
  %v1575 = vpop.f32.mrf.mxu0
  %v1576 = vadd.f32 %v1424, %v1575
  %v1577 = vpop.f32.mrf.mxu0
  %1578 = vmatprep.mubr.bf16.mxu0 0
  %1579 = vmatmul.mubr.bf16.gmra.mxu0 %v1396
  %v1580 = vpop.f32.mrf.mxu0
  %v1581 = vadd.f32 %v1424, %v1580
  %v1582 = vpop.f32.mrf.mxu0
  %v1583 = vpop.f32.mrf.mxu0
  %v1584 = vadd.f32 %v1424, %v1583
  %v1585 = vpop.f32.mrf.mxu0
  %1586 = vmatprep.mubr.bf16.mxu0 0
  %1587 = vmatmul.mubr.bf16.gmra.mxu0 %v1397
  %v1588 = vpop.f32.mrf.mxu0
  %v1589 = vadd.f32 %v1424, %v1588
  %v1590 = vpop.f32.mrf.mxu0
  %v1591 = vpop.f32.mrf.mxu0
  %v1592 = vadd.f32 %v1424, %v1591
  %v1593 = vpop.f32.mrf.mxu0
  %1594 = vmatprep.mubr.bf16.mxu0 0
  %1595 = vmatmul.mubr.bf16.gmra.mxu0 %v1398
  %v1596 = vpop.f32.mrf.mxu0
  %v1597 = vadd.f32 %v1424, %v1596
  %v1598 = vpop.f32.mrf.mxu0
  %v1599 = vpop.f32.mrf.mxu0
  %v1600 = vadd.f32 %v1424, %v1599
  %v1601 = vpop.f32.mrf.mxu0
  %1602 = vmatprep.mubr.bf16.mxu0 0
  %1603 = vmatmul.mubr.bf16.gmra.mxu0 %v1399
  %v1604 = vpop.f32.mrf.mxu0
  %v1605 = vadd.f32 %v1424, %v1604
  %v1606 = vpop.f32.mrf.mxu0
  %v1607 = vpop.f32.mrf.mxu0
  %v1608 = vadd.f32 %v1424, %v1607
  %v1609 = vpop.f32.mrf.mxu0
  %1610 = vmatprep.mubr.bf16.mxu0 0
  %1611 = vmatmul.mubr.bf16.gmra.mxu0 %v1400
  %v1612 = vpop.f32.mrf.mxu0
  %v1613 = vadd.f32 %v1424, %v1612
  %v1614 = vpop.f32.mrf.mxu0
  %v1615 = vpop.f32.mrf.mxu0
  %v1616 = vadd.f32 %v1424, %v1615
  %v1617 = vpop.f32.mrf.mxu0
  %1618 = vmatprep.mubr.bf16.mxu0 0
  %1619 = vmatmul.mubr.bf16.gmra.mxu0 %v1401
  %v1620 = vpop.f32.mrf.mxu0
  %v1621 = vadd.f32 %v1424, %v1620
  %v1622 = vpop.f32.mrf.mxu0
  %v1623 = vpop.f32.mrf.mxu0
  %v1624 = vadd.f32 %v1424, %v1623
  %v1625 = vpop.f32.mrf.mxu0
  %1626 = vmatprep.mubr.bf16.mxu0 0
  %1627 = vmatmul.mubr.bf16.gmra.mxu0 %v1402
  %v1628 = vpop.f32.mrf.mxu0
  %v1629 = vadd.f32 %v1424, %v1628
  %v1630 = vpop.f32.mrf.mxu0
  %v1631 = vpop.f32.mrf.mxu0
  %v1632 = vadd.f32 %v1424, %v1631
  %v1633 = vpop.f32.mrf.mxu0
  %1634 = vdwg.mxu0
  %v1635 = vmax.f32 %v1509, 0.0
  %v1636 = vmax.f32 %v1512, 0.0
  %v1637 = vmax.f32 %v1517, 0.0
  %v1638 = vmax.f32 %v1520, 0.0
  %v1639 = vmax.f32 %v1525, 0.0
  %v1640 = vmax.f32 %v1528, 0.0
  %v1641 = vmax.f32 %v1533, 0.0
  %v1642 = vmax.f32 %v1536, 0.0
  %v1643 = vmax.f32 %v1541, 0.0
  %v1644 = vmax.f32 %v1544, 0.0
  %v1645 = vmax.f32 %v1549, 0.0
  %v1646 = vmax.f32 %v1552, 0.0
  %v1647 = vmax.f32 %v1557, 0.0
  %v1648 = vmax.f32 %v1560, 0.0
  %v1649 = vmax.f32 %v1565, 0.0
  %v1650 = vmax.f32 %v1568, 0.0
  %v1651 = vmax.f32 %v1573, 0.0
  %v1652 = vmax.f32 %v1576, 0.0
  %v1653 = vmax.f32 %v1581, 0.0
  %v1654 = vmax.f32 %v1584, 0.0
  %v1655 = vmax.f32 %v1589, 0.0
  %v1656 = vmax.f32 %v1592, 0.0
  %v1657 = vmax.f32 %v1597, 0.0
  %v1658 = vmax.f32 %v1600, 0.0
  %v1659 = vmax.f32 %v1605, 0.0
  %v1660 = vmax.f32 %v1608, 0.0
  %v1661 = vmax.f32 %v1613, 0.0
  %v1662 = vmax.f32 %v1616, 0.0
  %v1663 = vmax.f32 %v1621, 0.0
  %v1664 = vmax.f32 %v1624, 0.0
  %v1665 = vmax.f32 %v1629, 0.0
  %v1666 = vmax.f32 %v1632, 0.0
  %v1667 = vpack.c.bf16 %v1636, %v1635
  %v1668 = vpack.c.bf16 %v1638, %v1637
  %v1669 = vpack.c.bf16 %v1640, %v1639
  %v1670 = vpack.c.bf16 %v1642, %v1641
  %v1671 = vpack.c.bf16 %v1644, %v1643
  %v1672 = vpack.c.bf16 %v1646, %v1645
  %v1673 = vpack.c.bf16 %v1648, %v1647
  %v1674 = vpack.c.bf16 %v1650, %v1649
  %v1675 = vpack.c.bf16 %v1652, %v1651
  %v1676 = vpack.c.bf16 %v1654, %v1653
  %v1677 = vpack.c.bf16 %v1656, %v1655
  %v1678 = vpack.c.bf16 %v1658, %v1657
  %v1679 = vpack.c.bf16 %v1660, %v1659
  %v1680 = vpack.c.bf16 %v1662, %v1661
  %v1681 = vpack.c.bf16 %v1664, %v1663
  %v1682 = vpack.c.bf16 %v1666, %v1665
  %v1683 = vld [vmem:[%s11] sm:$0xf]
  %v1684 = vld [vmem:[%s11 + $0x4] sm:$0xf]
  %v1685 = vld [vmem:[%s11 + $0x8] sm:$0xf]
  %v1686 = vld [vmem:[%s11 + $0xc] sm:$0xf]
  %v1687 = vld [vmem:[%s11 + $0x10] sm:$0xf]
  %v1688 = vld [vmem:[%s11 + $0x14] sm:$0xf]
  %v1689 = vld [vmem:[%s11 + $0x18] sm:$0xf]
  %v1690 = vld [vmem:[%s11 + $0x1c] sm:$0xf]
  %v1691 = vld [vmem:[%s12] sm:$0x1]
  %v1693 = vlaneseq
  %v1694 = vshrl.u32 %v1693, 7
  %v1695 = vsub.s32 0, %v1694
  %v1696 = vrot.slane %v1691, %v1695
  %v1706 = vunpack.c.l.b16 %v1683
  %v1707 = vunpack.c.l.b16 %v1684
  %v1708 = vunpack.c.l.b16 %v1685
  %v1709 = vunpack.c.l.b16 %v1686
  %v1710 = vunpack.c.l.b16 %v1687
  %v1711 = vunpack.c.l.b16 %v1688
  %v1712 = vunpack.c.l.b16 %v1689
  %v1713 = vunpack.c.l.b16 %v1690
  %v1714 = vpack.c.b16 %v1707, %v1706
  %v1715 = vpack.c.b16 %v1709, %v1708
  %v1716 = vpack.c.b16 %v1711, %v1710
  %v1717 = vpack.c.b16 %v1713, %v1712
  %v1723 = vsel %vm1144, %v1667, 0
  %v1726 = vsel %vm1144, %v1668, 0
  %v1729 = vsel %vm1144, %v1669, 0
  %v1732 = vsel %vm1144, %v1670, 0
  %v1735 = vsel %vm1144, %v1671, 0
  %v1738 = vsel %vm1144, %v1672, 0
  %v1741 = vsel %vm1144, %v1673, 0
  %v1744 = vsel %vm1144, %v1674, 0
  %v1747 = vsel %vm1144, %v1675, 0
  %v1750 = vsel %vm1144, %v1676, 0
  %v1753 = vsel %vm1144, %v1677, 0
  %v1756 = vsel %vm1144, %v1678, 0
  %v1759 = vsel %vm1144, %v1679, 0
  %v1762 = vsel %vm1144, %v1680, 0
  %v1765 = vsel %vm1144, %v1681, 0
  %v1768 = vsel %vm1144, %v1682, 0
  %1770 = vmatprep.subr.bf16.mxu0 0
  %1771 = vmatpush1.bf16.msra.mxu0 0
  %1772 = vmatprep.subr.bf16.mxu0 0
  %1773 = vmatpush1.bf16.msra.mxu0 0
  %1774 = vmatprep.subr.bf16.mxu0 0
  %1775 = vmatpush1.bf16.msra.mxu0 0
  %1776 = vmatprep.subr.bf16.mxu0 0
  %1777 = vmatpush1.bf16.msra.mxu0 0
  %1778 = vmatprep.subr.bf16.mxu0 0
  %1779 = vmatpush1.bf16.msra.mxu0 %v1717
  %1780 = vmatprep.subr.bf16.mxu0 0
  %1781 = vmatpush1.bf16.msra.mxu0 %v1716
  %1782 = vmatprep.subr.bf16.mxu0 0
  %1783 = vmatpush1.bf16.msra.mxu0 %v1715
  %1784 = vmatprep.subr.bf16.mxu0 0
  %1785 = vmatpush1.bf16.msra.mxu0 %v1714
  %1786 = vmatprep.subr.bf16.mxu0 0
  %1787 = vmatpush2.bf16.msra.mxu0 0
  %1788 = vmatprep.subr.bf16.mxu0 0
  %1789 = vmatpush2.bf16.msra.mxu0 0
  %1790 = vmatprep.subr.bf16.mxu0 0
  %1791 = vmatpush2.bf16.msra.mxu0 0
  %1792 = vmatprep.subr.bf16.mxu0 0
  %1793 = vmatpush2.bf16.msra.mxu0 0
  %1794 = vmatprep.subr.bf16.mxu0 0
  %1795 = vmatpush2.bf16.msra.mxu0 0
  %1796 = vmatprep.subr.bf16.mxu0 0
  %1797 = vmatpush2.bf16.msra.mxu0 0
  %1798 = vmatprep.subr.bf16.mxu0 0
  %1799 = vmatpush2.bf16.msra.mxu0 0
  %1800 = vmatprep.subr.bf16.mxu0 0
  %1801 = vmatpush2.bf16.msra.mxu0 0
  %1802 = vmatprep.mubr.bf16.mxu0 0
  %1803 = vmatmul.mubr.bf16.gmra.mxu0 %v1723
  %v1804 = vpop.f32.mrf.mxu0
  %v1805 = vadd.f32 %v1696, %v1804
  %v1806 = vpop.f32.mrf.mxu0
  %v1807 = vpop.f32.mrf.mxu0
  %v1808 = vadd.f32 %v1696, %v1807
  %v1809 = vpop.f32.mrf.mxu0
  %1810 = vmatprep.mubr.bf16.mxu0 0
  %1811 = vmatmul.mubr.bf16.gmra.mxu0 %v1726
  %v1812 = vpop.f32.mrf.mxu0
  %v1813 = vadd.f32 %v1696, %v1812
  %v1814 = vpop.f32.mrf.mxu0
  %v1815 = vpop.f32.mrf.mxu0
  %v1816 = vadd.f32 %v1696, %v1815
  %v1817 = vpop.f32.mrf.mxu0
  %1818 = vmatprep.mubr.bf16.mxu0 0
  %1819 = vmatmul.mubr.bf16.gmra.mxu0 %v1729
  %v1820 = vpop.f32.mrf.mxu0
  %v1821 = vadd.f32 %v1696, %v1820
  %v1822 = vpop.f32.mrf.mxu0
  %v1823 = vpop.f32.mrf.mxu0
  %v1824 = vadd.f32 %v1696, %v1823
  %v1825 = vpop.f32.mrf.mxu0
  %1826 = vmatprep.mubr.bf16.mxu0 0
  %1827 = vmatmul.mubr.bf16.gmra.mxu0 %v1732
  %v1828 = vpop.f32.mrf.mxu0
  %v1829 = vadd.f32 %v1696, %v1828
  %v1830 = vpop.f32.mrf.mxu0
  %v1831 = vpop.f32.mrf.mxu0
  %v1832 = vadd.f32 %v1696, %v1831
  %v1833 = vpop.f32.mrf.mxu0
  %1834 = vmatprep.mubr.bf16.mxu0 0
  %1835 = vmatmul.mubr.bf16.gmra.mxu0 %v1735
  %v1836 = vpop.f32.mrf.mxu0
  %v1837 = vadd.f32 %v1696, %v1836
  %v1838 = vpop.f32.mrf.mxu0
  %v1839 = vpop.f32.mrf.mxu0
  %v1840 = vadd.f32 %v1696, %v1839
  %v1841 = vpop.f32.mrf.mxu0
  %1842 = vmatprep.mubr.bf16.mxu0 0
  %1843 = vmatmul.mubr.bf16.gmra.mxu0 %v1738
  %v1844 = vpop.f32.mrf.mxu0
  %v1845 = vadd.f32 %v1696, %v1844
  %v1846 = vpop.f32.mrf.mxu0
  %v1847 = vpop.f32.mrf.mxu0
  %v1848 = vadd.f32 %v1696, %v1847
  %v1849 = vpop.f32.mrf.mxu0
  %1850 = vmatprep.mubr.bf16.mxu0 0
  %1851 = vmatmul.mubr.bf16.gmra.mxu0 %v1741
  %v1852 = vpop.f32.mrf.mxu0
  %v1853 = vadd.f32 %v1696, %v1852
  %v1854 = vpop.f32.mrf.mxu0
  %v1855 = vpop.f32.mrf.mxu0
  %v1856 = vadd.f32 %v1696, %v1855
  %v1857 = vpop.f32.mrf.mxu0
  %1858 = vmatprep.mubr.bf16.mxu0 0
  %1859 = vmatmul.mubr.bf16.gmra.mxu0 %v1744
  %v1860 = vpop.f32.mrf.mxu0
  %v1861 = vadd.f32 %v1696, %v1860
  %v1862 = vpop.f32.mrf.mxu0
  %v1863 = vpop.f32.mrf.mxu0
  %v1864 = vadd.f32 %v1696, %v1863
  %v1865 = vpop.f32.mrf.mxu0
  %1866 = vmatprep.mubr.bf16.mxu0 0
  %1867 = vmatmul.mubr.bf16.gmra.mxu0 %v1747
  %v1868 = vpop.f32.mrf.mxu0
  %v1869 = vadd.f32 %v1696, %v1868
  %v1870 = vpop.f32.mrf.mxu0
  %v1871 = vpop.f32.mrf.mxu0
  %v1872 = vadd.f32 %v1696, %v1871
  %v1873 = vpop.f32.mrf.mxu0
  %1874 = vmatprep.mubr.bf16.mxu0 0
  %1875 = vmatmul.mubr.bf16.gmra.mxu0 %v1750
  %v1876 = vpop.f32.mrf.mxu0
  %v1877 = vadd.f32 %v1696, %v1876
  %v1878 = vpop.f32.mrf.mxu0
  %v1879 = vpop.f32.mrf.mxu0
  %v1880 = vadd.f32 %v1696, %v1879
  %v1881 = vpop.f32.mrf.mxu0
  %1882 = vmatprep.mubr.bf16.mxu0 0
  %1883 = vmatmul.mubr.bf16.gmra.mxu0 %v1753
  %v1884 = vpop.f32.mrf.mxu0
  %v1885 = vadd.f32 %v1696, %v1884
  %v1886 = vpop.f32.mrf.mxu0
  %v1887 = vpop.f32.mrf.mxu0
  %v1888 = vadd.f32 %v1696, %v1887
  %v1889 = vpop.f32.mrf.mxu0
  %1890 = vmatprep.mubr.bf16.mxu0 0
  %1891 = vmatmul.mubr.bf16.gmra.mxu0 %v1756
  %v1892 = vpop.f32.mrf.mxu0
  %v1893 = vadd.f32 %v1696, %v1892
  %v1894 = vpop.f32.mrf.mxu0
  %v1895 = vpop.f32.mrf.mxu0
  %v1896 = vadd.f32 %v1696, %v1895
  %v1897 = vpop.f32.mrf.mxu0
  %1898 = vmatprep.mubr.bf16.mxu0 0
  %1899 = vmatmul.mubr.bf16.gmra.mxu0 %v1759
  %v1900 = vpop.f32.mrf.mxu0
  %v1901 = vadd.f32 %v1696, %v1900
  %v1902 = vpop.f32.mrf.mxu0
  %v1903 = vpop.f32.mrf.mxu0
  %v1904 = vadd.f32 %v1696, %v1903
  %v1905 = vpop.f32.mrf.mxu0
  %1906 = vmatprep.mubr.bf16.mxu0 0
  %1907 = vmatmul.mubr.bf16.gmra.mxu0 %v1762
  %v1908 = vpop.f32.mrf.mxu0
  %v1909 = vadd.f32 %v1696, %v1908
  %v1910 = vpop.f32.mrf.mxu0
  %v1911 = vpop.f32.mrf.mxu0
  %v1912 = vadd.f32 %v1696, %v1911
  %v1913 = vpop.f32.mrf.mxu0
  %1914 = vmatprep.mubr.bf16.mxu0 0
  %1915 = vmatmul.mubr.bf16.gmra.mxu0 %v1765
  %v1916 = vpop.f32.mrf.mxu0
  %v1917 = vadd.f32 %v1696, %v1916
  %v1918 = vpop.f32.mrf.mxu0
  %v1919 = vpop.f32.mrf.mxu0
  %v1920 = vadd.f32 %v1696, %v1919
  %v1921 = vpop.f32.mrf.mxu0
  %1922 = vmatprep.mubr.bf16.mxu0 0
  %1923 = vmatmul.mubr.bf16.gmra.mxu0 %v1768
  %v1924 = vpop.f32.mrf.mxu0
  %v1925 = vadd.f32 %v1696, %v1924
  %v1926 = vpop.f32.mrf.mxu0
  %v1927 = vpop.f32.mrf.mxu0
  %v1928 = vadd.f32 %v1696, %v1927
  %v1929 = vpop.f32.mrf.mxu0
  %1930 = vdwg.mxu0
  %v1931 = vmax.f32 %v1805, 0.0
  %v1932 = vmax.f32 %v1808, 0.0
  %v1933 = vmax.f32 %v1813, 0.0
  %v1934 = vmax.f32 %v1816, 0.0
  %v1935 = vmax.f32 %v1821, 0.0
  %v1936 = vmax.f32 %v1824, 0.0
  %v1937 = vmax.f32 %v1829, 0.0
  %v1938 = vmax.f32 %v1832, 0.0
  %v1939 = vmax.f32 %v1837, 0.0
  %v1940 = vmax.f32 %v1840, 0.0
  %v1941 = vmax.f32 %v1845, 0.0
  %v1942 = vmax.f32 %v1848, 0.0
  %v1943 = vmax.f32 %v1853, 0.0
  %v1944 = vmax.f32 %v1856, 0.0
  %v1945 = vmax.f32 %v1861, 0.0
  %v1946 = vmax.f32 %v1864, 0.0
  %v1947 = vmax.f32 %v1869, 0.0
  %v1948 = vmax.f32 %v1872, 0.0
  %v1949 = vmax.f32 %v1877, 0.0
  %v1950 = vmax.f32 %v1880, 0.0
  %v1951 = vmax.f32 %v1885, 0.0
  %v1952 = vmax.f32 %v1888, 0.0
  %v1953 = vmax.f32 %v1893, 0.0
  %v1954 = vmax.f32 %v1896, 0.0
  %v1955 = vmax.f32 %v1901, 0.0
  %v1956 = vmax.f32 %v1904, 0.0
  %v1957 = vmax.f32 %v1909, 0.0
  %v1958 = vmax.f32 %v1912, 0.0
  %v1959 = vmax.f32 %v1917, 0.0
  %v1960 = vmax.f32 %v1920, 0.0
  %v1961 = vmax.f32 %v1925, 0.0
  %v1962 = vmax.f32 %v1928, 0.0
  %v1963 = vpack.c.bf16 %v1932, %v1931
  %v1964 = vpack.c.bf16 %v1934, %v1933
  %v1965 = vpack.c.bf16 %v1936, %v1935
  %v1966 = vpack.c.bf16 %v1938, %v1937
  %v1967 = vpack.c.bf16 %v1940, %v1939
  %v1968 = vpack.c.bf16 %v1942, %v1941
  %v1969 = vpack.c.bf16 %v1944, %v1943
  %v1970 = vpack.c.bf16 %v1946, %v1945
  %v1971 = vpack.c.bf16 %v1948, %v1947
  %v1972 = vpack.c.bf16 %v1950, %v1949
  %v1973 = vpack.c.bf16 %v1952, %v1951
  %v1974 = vpack.c.bf16 %v1954, %v1953
  %v1975 = vpack.c.bf16 %v1956, %v1955
  %v1976 = vpack.c.bf16 %v1958, %v1957
  %v1977 = vpack.c.bf16 %v1960, %v1959
  %v1978 = vpack.c.bf16 %v1962, %v1961
  %v1979 = vld [vmem:[%s13] sm:$0xff]
  %v1980 = vld [vmem:[%s13 + $0x8] sm:$0xff]
  %v1981 = vld [vmem:[%s13 + $0x10] sm:$0xff]
  %v1982 = vld [vmem:[%s13 + $0x18] sm:$0xff]
  %v1983 = vld [vmem:[%s13 + $0x20] sm:$0xff]
  %v1984 = vld [vmem:[%s13 + $0x28] sm:$0xff]
  %v1985 = vld [vmem:[%s13 + $0x30] sm:$0xff]
  %v1986 = vld [vmem:[%s13 + $0x38] sm:$0xff]
  %v1987 = vld [vmem:[%s13 + $0x40] sm:$0xff]
  %v1988 = vld [vmem:[%s13 + $0x48] sm:$0xff]
  %v1989 = vld [vmem:[%s13 + $0x50] sm:$0xff]
  %v1990 = vld [vmem:[%s13 + $0x58] sm:$0xff]
  %v1991 = vld [vmem:[%s13 + $0x60] sm:$0xff]
  %v1992 = vld [vmem:[%s13 + $0x68] sm:$0xff]
  %v1993 = vld [vmem:[%s13 + $0x70] sm:$0xff]
  %v1994 = vld [vmem:[%s13 + $0x78] sm:$0xff]
  %v1995 = vld [vmem:[%s14] sm:$0x3]
  %v1997 = vlaneseq
  %v1998 = vshrl.u32 %v1997, 7
  %v1999 = vsub.s32 0, %v1998
  %v2000 = vrot.slane %v1995, %v1999
  %v2001 = vlaneseq
  %v2002 = vshrl.u32 %v2001, 7
  %v2003 = vsub.s32 1, %v2002
  %v2004 = vrot.slane %v1995, %v2003
  %v2023 = vunpack.c.l.b16 %v1979
  %v2024 = vunpack.c.h.b16 %v1979
  %v2025 = vunpack.c.l.b16 %v1980
  %v2026 = vunpack.c.h.b16 %v1980
  %v2027 = vunpack.c.l.b16 %v1981
  %v2028 = vunpack.c.h.b16 %v1981
  %v2029 = vunpack.c.l.b16 %v1982
  %v2030 = vunpack.c.h.b16 %v1982
  %v2031 = vunpack.c.l.b16 %v1983
  %v2032 = vunpack.c.h.b16 %v1983
  %v2033 = vunpack.c.l.b16 %v1984
  %v2034 = vunpack.c.h.b16 %v1984
  %v2035 = vunpack.c.l.b16 %v1985
  %v2036 = vunpack.c.h.b16 %v1985
  %v2037 = vunpack.c.l.b16 %v1986
  %v2038 = vunpack.c.h.b16 %v1986
  %v2039 = vunpack.c.l.b16 %v1987
  %v2040 = vunpack.c.h.b16 %v1987
  %v2041 = vunpack.c.l.b16 %v1988
  %v2042 = vunpack.c.h.b16 %v1988
  %v2043 = vunpack.c.l.b16 %v1989
  %v2044 = vunpack.c.h.b16 %v1989
  %v2045 = vunpack.c.l.b16 %v1990
  %v2046 = vunpack.c.h.b16 %v1990
  %v2047 = vunpack.c.l.b16 %v1991
  %v2048 = vunpack.c.h.b16 %v1991
  %v2049 = vunpack.c.l.b16 %v1992
  %v2050 = vunpack.c.h.b16 %v1992
  %v2051 = vunpack.c.l.b16 %v1993
  %v2052 = vunpack.c.h.b16 %v1993
  %v2053 = vunpack.c.l.b16 %v1994
  %v2054 = vunpack.c.h.b16 %v1994
  %v2055 = vpack.c.b16 %v2025, %v2023
  %v2056 = vpack.c.b16 %v2026, %v2024
  %v2057 = vpack.c.b16 %v2029, %v2027
  %v2058 = vpack.c.b16 %v2030, %v2028
  %v2059 = vpack.c.b16 %v2033, %v2031
  %v2060 = vpack.c.b16 %v2034, %v2032
  %v2061 = vpack.c.b16 %v2037, %v2035
  %v2062 = vpack.c.b16 %v2038, %v2036
  %v2063 = vpack.c.b16 %v2041, %v2039
  %v2064 = vpack.c.b16 %v2042, %v2040
  %v2065 = vpack.c.b16 %v2045, %v2043
  %v2066 = vpack.c.b16 %v2046, %v2044
  %v2067 = vpack.c.b16 %v2049, %v2047
  %v2068 = vpack.c.b16 %v2050, %v2048
  %v2069 = vpack.c.b16 %v2053, %v2051
  %v2070 = vpack.c.b16 %v2054, %v2052
  %2087 = vmatprep.subr.bf16.mxu0 %v2070
  %2088 = vmatpush1.bf16.msra.mxu0 %v2069
  %2089 = vmatprep.subr.bf16.mxu0 %v2068
  %2090 = vmatpush1.bf16.msra.mxu0 %v2067
  %2091 = vmatprep.subr.bf16.mxu0 %v2066
  %2092 = vmatpush1.bf16.msra.mxu0 %v2065
  %2093 = vmatprep.subr.bf16.mxu0 %v2064
  %2094 = vmatpush1.bf16.msra.mxu0 %v2063
  %2095 = vmatprep.subr.bf16.mxu0 %v2062
  %2096 = vmatpush1.bf16.msra.mxu0 %v2061
  %2097 = vmatprep.subr.bf16.mxu0 %v2060
  %2098 = vmatpush1.bf16.msra.mxu0 %v2059
  %2099 = vmatprep.subr.bf16.mxu0 %v2058
  %2100 = vmatpush1.bf16.msra.mxu0 %v2057
  %2101 = vmatprep.subr.bf16.mxu0 %v2056
  %2102 = vmatpush1.bf16.msra.mxu0 %v2055
  %2103 = vmatprep.subr.bf16.mxu0 0
  %2104 = vmatpush2.bf16.msra.mxu0 0
  %2105 = vmatprep.subr.bf16.mxu0 0
  %2106 = vmatpush2.bf16.msra.mxu0 0
  %2107 = vmatprep.subr.bf16.mxu0 0
  %2108 = vmatpush2.bf16.msra.mxu0 0
  %2109 = vmatprep.subr.bf16.mxu0 0
  %2110 = vmatpush2.bf16.msra.mxu0 0
  %2111 = vmatprep.subr.bf16.mxu0 0
  %2112 = vmatpush2.bf16.msra.mxu0 0
  %2113 = vmatprep.subr.bf16.mxu0 0
  %2114 = vmatpush2.bf16.msra.mxu0 0
  %2115 = vmatprep.subr.bf16.mxu0 0
  %2116 = vmatpush2.bf16.msra.mxu0 0
  %2117 = vmatprep.subr.bf16.mxu0 0
  %2118 = vmatpush2.bf16.msra.mxu0 0
  %2119 = vmatprep.mubr.bf16.mxu0 0
  %2120 = vmatmul.mubr.bf16.gmra.mxu0 %v1963
  %v2121 = vpop.f32.mrf.mxu0
  %v2122 = vadd.f32 %v2000, %v2121
  %v2123 = vpop.f32.mrf.mxu0
  %v2124 = vadd.f32 %v2004, %v2123
  %v2125 = vpop.f32.mrf.mxu0
  %v2126 = vadd.f32 %v2000, %v2125
  %v2127 = vpop.f32.mrf.mxu0
  %v2128 = vadd.f32 %v2004, %v2127
  %2129 = vmatprep.mubr.bf16.mxu0 0
  %2130 = vmatmul.mubr.bf16.gmra.mxu0 %v1964
  %v2131 = vpop.f32.mrf.mxu0
  %v2132 = vadd.f32 %v2000, %v2131
  %v2133 = vpop.f32.mrf.mxu0
  %v2134 = vadd.f32 %v2004, %v2133
  %v2135 = vpop.f32.mrf.mxu0
  %v2136 = vadd.f32 %v2000, %v2135
  %v2137 = vpop.f32.mrf.mxu0
  %v2138 = vadd.f32 %v2004, %v2137
  %2139 = vmatprep.mubr.bf16.mxu0 0
  %2140 = vmatmul.mubr.bf16.gmra.mxu0 %v1965
  %v2141 = vpop.f32.mrf.mxu0
  %v2142 = vadd.f32 %v2000, %v2141
  %v2143 = vpop.f32.mrf.mxu0
  %v2144 = vadd.f32 %v2004, %v2143
  %v2145 = vpop.f32.mrf.mxu0
  %v2146 = vadd.f32 %v2000, %v2145
  %v2147 = vpop.f32.mrf.mxu0
  %v2148 = vadd.f32 %v2004, %v2147
  %2149 = vmatprep.mubr.bf16.mxu0 0
  %2150 = vmatmul.mubr.bf16.gmra.mxu0 %v1966
  %v2151 = vpop.f32.mrf.mxu0
  %v2152 = vadd.f32 %v2000, %v2151
  %v2153 = vpop.f32.mrf.mxu0
  %v2154 = vadd.f32 %v2004, %v2153
  %v2155 = vpop.f32.mrf.mxu0
  %v2156 = vadd.f32 %v2000, %v2155
  %v2157 = vpop.f32.mrf.mxu0
  %v2158 = vadd.f32 %v2004, %v2157
  %2159 = vmatprep.mubr.bf16.mxu0 0
  %2160 = vmatmul.mubr.bf16.gmra.mxu0 %v1967
  %v2161 = vpop.f32.mrf.mxu0
  %v2162 = vadd.f32 %v2000, %v2161
  %v2163 = vpop.f32.mrf.mxu0
  %v2164 = vadd.f32 %v2004, %v2163
  %v2165 = vpop.f32.mrf.mxu0
  %v2166 = vadd.f32 %v2000, %v2165
  %v2167 = vpop.f32.mrf.mxu0
  %v2168 = vadd.f32 %v2004, %v2167
  %2169 = vmatprep.mubr.bf16.mxu0 0
  %2170 = vmatmul.mubr.bf16.gmra.mxu0 %v1968
  %v2171 = vpop.f32.mrf.mxu0
  %v2172 = vadd.f32 %v2000, %v2171
  %v2173 = vpop.f32.mrf.mxu0
  %v2174 = vadd.f32 %v2004, %v2173
  %v2175 = vpop.f32.mrf.mxu0
  %v2176 = vadd.f32 %v2000, %v2175
  %v2177 = vpop.f32.mrf.mxu0
  %v2178 = vadd.f32 %v2004, %v2177
  %2179 = vmatprep.mubr.bf16.mxu0 0
  %2180 = vmatmul.mubr.bf16.gmra.mxu0 %v1969
  %v2181 = vpop.f32.mrf.mxu0
  %v2182 = vadd.f32 %v2000, %v2181
  %v2183 = vpop.f32.mrf.mxu0
  %v2184 = vadd.f32 %v2004, %v2183
  %v2185 = vpop.f32.mrf.mxu0
  %v2186 = vadd.f32 %v2000, %v2185
  %v2187 = vpop.f32.mrf.mxu0
  %v2188 = vadd.f32 %v2004, %v2187
  %2189 = vmatprep.mubr.bf16.mxu0 0
  %2190 = vmatmul.mubr.bf16.gmra.mxu0 %v1970
  %v2191 = vpop.f32.mrf.mxu0
  %v2192 = vadd.f32 %v2000, %v2191
  %v2193 = vpop.f32.mrf.mxu0
  %v2194 = vadd.f32 %v2004, %v2193
  %v2195 = vpop.f32.mrf.mxu0
  %v2196 = vadd.f32 %v2000, %v2195
  %v2197 = vpop.f32.mrf.mxu0
  %v2198 = vadd.f32 %v2004, %v2197
  %2199 = vmatprep.mubr.bf16.mxu0 0
  %2200 = vmatmul.mubr.bf16.gmra.mxu0 %v1971
  %v2201 = vpop.f32.mrf.mxu0
  %v2202 = vadd.f32 %v2000, %v2201
  %v2203 = vpop.f32.mrf.mxu0
  %v2204 = vadd.f32 %v2004, %v2203
  %v2205 = vpop.f32.mrf.mxu0
  %v2206 = vadd.f32 %v2000, %v2205
  %v2207 = vpop.f32.mrf.mxu0
  %v2208 = vadd.f32 %v2004, %v2207
  %2209 = vmatprep.mubr.bf16.mxu0 0
  %2210 = vmatmul.mubr.bf16.gmra.mxu0 %v1972
  %v2211 = vpop.f32.mrf.mxu0
  %v2212 = vadd.f32 %v2000, %v2211
  %v2213 = vpop.f32.mrf.mxu0
  %v2214 = vadd.f32 %v2004, %v2213
  %v2215 = vpop.f32.mrf.mxu0
  %v2216 = vadd.f32 %v2000, %v2215
  %v2217 = vpop.f32.mrf.mxu0
  %v2218 = vadd.f32 %v2004, %v2217
  %2219 = vmatprep.mubr.bf16.mxu0 0
  %2220 = vmatmul.mubr.bf16.gmra.mxu0 %v1973
  %v2221 = vpop.f32.mrf.mxu0
  %v2222 = vadd.f32 %v2000, %v2221
  %v2223 = vpop.f32.mrf.mxu0
  %v2224 = vadd.f32 %v2004, %v2223
  %v2225 = vpop.f32.mrf.mxu0
  %v2226 = vadd.f32 %v2000, %v2225
  %v2227 = vpop.f32.mrf.mxu0
  %v2228 = vadd.f32 %v2004, %v2227
  %2229 = vmatprep.mubr.bf16.mxu0 0
  %2230 = vmatmul.mubr.bf16.gmra.mxu0 %v1974
  %v2231 = vpop.f32.mrf.mxu0
  %v2232 = vadd.f32 %v2000, %v2231
  %v2233 = vpop.f32.mrf.mxu0
  %v2234 = vadd.f32 %v2004, %v2233
  %v2235 = vpop.f32.mrf.mxu0
  %v2236 = vadd.f32 %v2000, %v2235
  %v2237 = vpop.f32.mrf.mxu0
  %v2238 = vadd.f32 %v2004, %v2237
  %2239 = vmatprep.mubr.bf16.mxu0 0
  %2240 = vmatmul.mubr.bf16.gmra.mxu0 %v1975
  %v2241 = vpop.f32.mrf.mxu0
  %v2242 = vadd.f32 %v2000, %v2241
  %v2243 = vpop.f32.mrf.mxu0
  %v2244 = vadd.f32 %v2004, %v2243
  %v2245 = vpop.f32.mrf.mxu0
  %v2246 = vadd.f32 %v2000, %v2245
  %v2247 = vpop.f32.mrf.mxu0
  %v2248 = vadd.f32 %v2004, %v2247
  %2249 = vmatprep.mubr.bf16.mxu0 0
  %2250 = vmatmul.mubr.bf16.gmra.mxu0 %v1976
  %v2251 = vpop.f32.mrf.mxu0
  %v2252 = vadd.f32 %v2000, %v2251
  %v2253 = vpop.f32.mrf.mxu0
  %v2254 = vadd.f32 %v2004, %v2253
  %v2255 = vpop.f32.mrf.mxu0
  %v2256 = vadd.f32 %v2000, %v2255
  %v2257 = vpop.f32.mrf.mxu0
  %v2258 = vadd.f32 %v2004, %v2257
  %2259 = vmatprep.mubr.bf16.mxu0 0
  %2260 = vmatmul.mubr.bf16.gmra.mxu0 %v1977
  %v2261 = vpop.f32.mrf.mxu0
  %v2262 = vadd.f32 %v2000, %v2261
  %v2263 = vpop.f32.mrf.mxu0
  %v2264 = vadd.f32 %v2004, %v2263
  %v2265 = vpop.f32.mrf.mxu0
  %v2266 = vadd.f32 %v2000, %v2265
  %v2267 = vpop.f32.mrf.mxu0
  %v2268 = vadd.f32 %v2004, %v2267
  %2269 = vmatprep.mubr.bf16.mxu0 0
  %2270 = vmatmul.mubr.bf16.gmra.mxu0 %v1978
  %v2271 = vpop.f32.mrf.mxu0
  %v2272 = vadd.f32 %v2000, %v2271
  %v2273 = vpop.f32.mrf.mxu0
  %v2274 = vadd.f32 %v2004, %v2273
  %v2275 = vpop.f32.mrf.mxu0
  %v2276 = vadd.f32 %v2000, %v2275
  %v2277 = vpop.f32.mrf.mxu0
  %v2278 = vadd.f32 %v2004, %v2277
  %2279 = vdwg.mxu0
  %v2280 = vmax.f32 %v2122, 0.0
  %v2281 = vmax.f32 %v2124, 0.0
  %v2282 = vmax.f32 %v2126, 0.0
  %v2283 = vmax.f32 %v2128, 0.0
  %v2284 = vmax.f32 %v2132, 0.0
  %v2285 = vmax.f32 %v2134, 0.0
  %v2286 = vmax.f32 %v2136, 0.0
  %v2287 = vmax.f32 %v2138, 0.0
  %v2288 = vmax.f32 %v2142, 0.0
  %v2289 = vmax.f32 %v2144, 0.0
  %v2290 = vmax.f32 %v2146, 0.0
  %v2291 = vmax.f32 %v2148, 0.0
  %v2292 = vmax.f32 %v2152, 0.0
  %v2293 = vmax.f32 %v2154, 0.0
  %v2294 = vmax.f32 %v2156, 0.0
  %v2295 = vmax.f32 %v2158, 0.0
  %v2296 = vmax.f32 %v2162, 0.0
  %v2297 = vmax.f32 %v2164, 0.0
  %v2298 = vmax.f32 %v2166, 0.0
  %v2299 = vmax.f32 %v2168, 0.0
  %v2300 = vmax.f32 %v2172, 0.0
  %v2301 = vmax.f32 %v2174, 0.0
  %v2302 = vmax.f32 %v2176, 0.0
  %v2303 = vmax.f32 %v2178, 0.0
  %v2304 = vmax.f32 %v2182, 0.0
  %v2305 = vmax.f32 %v2184, 0.0
  %v2306 = vmax.f32 %v2186, 0.0
  %v2307 = vmax.f32 %v2188, 0.0
  %v2308 = vmax.f32 %v2192, 0.0
  %v2309 = vmax.f32 %v2194, 0.0
  %v2310 = vmax.f32 %v2196, 0.0
  %v2311 = vmax.f32 %v2198, 0.0
  %v2312 = vmax.f32 %v2202, 0.0
  %v2313 = vmax.f32 %v2204, 0.0
  %v2314 = vmax.f32 %v2206, 0.0
  %v2315 = vmax.f32 %v2208, 0.0
  %v2316 = vmax.f32 %v2212, 0.0
  %v2317 = vmax.f32 %v2214, 0.0
  %v2318 = vmax.f32 %v2216, 0.0
  %v2319 = vmax.f32 %v2218, 0.0
  %v2320 = vmax.f32 %v2222, 0.0
  %v2321 = vmax.f32 %v2224, 0.0
  %v2322 = vmax.f32 %v2226, 0.0
  %v2323 = vmax.f32 %v2228, 0.0
  %v2324 = vmax.f32 %v2232, 0.0
  %v2325 = vmax.f32 %v2234, 0.0
  %v2326 = vmax.f32 %v2236, 0.0
  %v2327 = vmax.f32 %v2238, 0.0
  %v2328 = vmax.f32 %v2242, 0.0
  %v2329 = vmax.f32 %v2244, 0.0
  %v2330 = vmax.f32 %v2246, 0.0
  %v2331 = vmax.f32 %v2248, 0.0
  %v2332 = vmax.f32 %v2252, 0.0
  %v2333 = vmax.f32 %v2254, 0.0
  %v2334 = vmax.f32 %v2256, 0.0
  %v2335 = vmax.f32 %v2258, 0.0
  %v2336 = vmax.f32 %v2262, 0.0
  %v2337 = vmax.f32 %v2264, 0.0
  %v2338 = vmax.f32 %v2266, 0.0
  %v2339 = vmax.f32 %v2268, 0.0
  %v2340 = vmax.f32 %v2272, 0.0
  %v2341 = vmax.f32 %v2274, 0.0
  %v2342 = vmax.f32 %v2276, 0.0
  %v2343 = vmax.f32 %v2278, 0.0
  %v2344 = vpack.c.bf16 %v2282, %v2280
  %v2345 = vpack.c.bf16 %v2283, %v2281
  %v2346 = vpack.c.bf16 %v2286, %v2284
  %v2347 = vpack.c.bf16 %v2287, %v2285
  %v2348 = vpack.c.bf16 %v2290, %v2288
  %v2349 = vpack.c.bf16 %v2291, %v2289
  %v2350 = vpack.c.bf16 %v2294, %v2292
  %v2351 = vpack.c.bf16 %v2295, %v2293
  %v2352 = vpack.c.bf16 %v2298, %v2296
  %v2353 = vpack.c.bf16 %v2299, %v2297
  %v2354 = vpack.c.bf16 %v2302, %v2300
  %v2355 = vpack.c.bf16 %v2303, %v2301
  %v2356 = vpack.c.bf16 %v2306, %v2304
  %v2357 = vpack.c.bf16 %v2307, %v2305
  %v2358 = vpack.c.bf16 %v2310, %v2308
  %v2359 = vpack.c.bf16 %v2311, %v2309
  %v2360 = vpack.c.bf16 %v2314, %v2312
  %v2361 = vpack.c.bf16 %v2315, %v2313
  %v2362 = vpack.c.bf16 %v2318, %v2316
  %v2363 = vpack.c.bf16 %v2319, %v2317
  %v2364 = vpack.c.bf16 %v2322, %v2320
  %v2365 = vpack.c.bf16 %v2323, %v2321
  %v2366 = vpack.c.bf16 %v2326, %v2324
  %v2367 = vpack.c.bf16 %v2327, %v2325
  %v2368 = vpack.c.bf16 %v2330, %v2328
  %v2369 = vpack.c.bf16 %v2331, %v2329
  %v2370 = vpack.c.bf16 %v2334, %v2332
  %v2371 = vpack.c.bf16 %v2335, %v2333
  %v2372 = vpack.c.bf16 %v2338, %v2336
  %v2373 = vpack.c.bf16 %v2339, %v2337
  %v2374 = vpack.c.bf16 %v2342, %v2340
  %v2375 = vpack.c.bf16 %v2343, %v2341
  %v2376 = vld [vmem:[%s15] sm:$0xf]
  %v2377 = vld [vmem:[%s15 + $0x4] sm:$0xf]
  %v2378 = vld [vmem:[%s15 + $0x8] sm:$0xf]
  %v2379 = vld [vmem:[%s15 + $0xc] sm:$0xf]
  %v2380 = vld [vmem:[%s15 + $0x10] sm:$0xf]
  %v2381 = vld [vmem:[%s15 + $0x14] sm:$0xf]
  %v2382 = vld [vmem:[%s15 + $0x18] sm:$0xf]
  %v2383 = vld [vmem:[%s15 + $0x1c] sm:$0xf]
  %v2384 = vld [vmem:[%s15 + $0x20] sm:$0xf]
  %v2385 = vld [vmem:[%s15 + $0x24] sm:$0xf]
  %v2386 = vld [vmem:[%s15 + $0x28] sm:$0xf]
  %v2387 = vld [vmem:[%s15 + $0x2c] sm:$0xf]
  %v2388 = vld [vmem:[%s15 + $0x30] sm:$0xf]
  %v2389 = vld [vmem:[%s15 + $0x34] sm:$0xf]
  %v2390 = vld [vmem:[%s15 + $0x38] sm:$0xf]
  %v2391 = vld [vmem:[%s15 + $0x3c] sm:$0xf]
  %v2392 = vld [vmem:[%s15 + $0x40] sm:$0xf]
  %v2393 = vld [vmem:[%s15 + $0x44] sm:$0xf]
  %v2394 = vld [vmem:[%s15 + $0x48] sm:$0xf]
  %v2395 = vld [vmem:[%s15 + $0x4c] sm:$0xf]
  %v2396 = vld [vmem:[%s15 + $0x50] sm:$0xf]
  %v2397 = vld [vmem:[%s15 + $0x54] sm:$0xf]
  %v2398 = vld [vmem:[%s15 + $0x58] sm:$0xf]
  %v2399 = vld [vmem:[%s15 + $0x5c] sm:$0xf]
  %v2400 = vld [vmem:[%s15 + $0x60] sm:$0xf]
  %v2401 = vld [vmem:[%s15 + $0x64] sm:$0xf]
  %v2402 = vld [vmem:[%s15 + $0x68] sm:$0xf]
  %v2403 = vld [vmem:[%s15 + $0x6c] sm:$0xf]
  %v2404 = vld [vmem:[%s15 + $0x70] sm:$0xf]
  %v2405 = vld [vmem:[%s15 + $0x74] sm:$0xf]
  %v2406 = vld [vmem:[%s15 + $0x78] sm:$0xf]
  %v2407 = vld [vmem:[%s15 + $0x7c] sm:$0xf]
  %v2408 = vld [vmem:[%s16] sm:$0x1]
  %v2410 = vlaneseq
  %v2411 = vshrl.u32 %v2410, 7
  %v2412 = vsub.s32 0, %v2411
  %v2413 = vrot.slane %v2408, %v2412
  %v2447 = vunpack.c.l.b16 %v2376
  %v2448 = vunpack.c.l.b16 %v2377
  %v2449 = vunpack.c.l.b16 %v2378
  %v2450 = vunpack.c.l.b16 %v2379
  %v2451 = vunpack.c.l.b16 %v2380
  %v2452 = vunpack.c.l.b16 %v2381
  %v2453 = vunpack.c.l.b16 %v2382
  %v2454 = vunpack.c.l.b16 %v2383
  %v2455 = vunpack.c.l.b16 %v2384
  %v2456 = vunpack.c.l.b16 %v2385
  %v2457 = vunpack.c.l.b16 %v2386
  %v2458 = vunpack.c.l.b16 %v2387
  %v2459 = vunpack.c.l.b16 %v2388
  %v2460 = vunpack.c.l.b16 %v2389
  %v2461 = vunpack.c.l.b16 %v2390
  %v2462 = vunpack.c.l.b16 %v2391
  %v2463 = vunpack.c.l.b16 %v2392
  %v2464 = vunpack.c.l.b16 %v2393
  %v2465 = vunpack.c.l.b16 %v2394
  %v2466 = vunpack.c.l.b16 %v2395
  %v2467 = vunpack.c.l.b16 %v2396
  %v2468 = vunpack.c.l.b16 %v2397
  %v2469 = vunpack.c.l.b16 %v2398
  %v2470 = vunpack.c.l.b16 %v2399
  %v2471 = vunpack.c.l.b16 %v2400
  %v2472 = vunpack.c.l.b16 %v2401
  %v2473 = vunpack.c.l.b16 %v2402
  %v2474 = vunpack.c.l.b16 %v2403
  %v2475 = vunpack.c.l.b16 %v2404
  %v2476 = vunpack.c.l.b16 %v2405
  %v2477 = vunpack.c.l.b16 %v2406
  %v2478 = vunpack.c.l.b16 %v2407
  %v2479 = vpack.c.b16 %v2448, %v2447
  %v2480 = vpack.c.b16 %v2450, %v2449
  %v2481 = vpack.c.b16 %v2452, %v2451
  %v2482 = vpack.c.b16 %v2454, %v2453
  %v2483 = vpack.c.b16 %v2456, %v2455
  %v2484 = vpack.c.b16 %v2458, %v2457
  %v2485 = vpack.c.b16 %v2460, %v2459
  %v2486 = vpack.c.b16 %v2462, %v2461
  %v2487 = vpack.c.b16 %v2464, %v2463
  %v2488 = vpack.c.b16 %v2466, %v2465
  %v2489 = vpack.c.b16 %v2468, %v2467
  %v2490 = vpack.c.b16 %v2470, %v2469
  %v2491 = vpack.c.b16 %v2472, %v2471
  %v2492 = vpack.c.b16 %v2474, %v2473
  %v2493 = vpack.c.b16 %v2476, %v2475
  %v2494 = vpack.c.b16 %v2478, %v2477
  %2511 = vmatprep.subr.bf16.mxu0 0
  %2512 = vmatpush1.bf16.msra.mxu0 %v2486
  %2513 = vmatprep.subr.bf16.mxu0 0
  %2514 = vmatpush1.bf16.msra.mxu0 %v2485
  %2515 = vmatprep.subr.bf16.mxu0 0
  %2516 = vmatpush1.bf16.msra.mxu0 %v2484
  %2517 = vmatprep.subr.bf16.mxu0 0
  %2518 = vmatpush1.bf16.msra.mxu0 %v2483
  %2519 = vmatprep.subr.bf16.mxu0 0
  %2520 = vmatpush1.bf16.msra.mxu0 %v2482
  %2521 = vmatprep.subr.bf16.mxu0 0
  %2522 = vmatpush1.bf16.msra.mxu0 %v2481
  %2523 = vmatprep.subr.bf16.mxu0 0
  %2524 = vmatpush1.bf16.msra.mxu0 %v2480
  %2525 = vmatprep.subr.bf16.mxu0 0
  %2526 = vmatpush1.bf16.msra.mxu0 %v2479
  %2527 = vmatprep.subr.bf16.mxu0 0
  %2528 = vmatpush2.bf16.msra.mxu0 %v2494
  %2529 = vmatprep.subr.bf16.mxu0 0
  %2530 = vmatpush2.bf16.msra.mxu0 %v2493
  %2531 = vmatprep.subr.bf16.mxu0 0
  %2532 = vmatpush2.bf16.msra.mxu0 %v2492
  %2533 = vmatprep.subr.bf16.mxu0 0
  %2534 = vmatpush2.bf16.msra.mxu0 %v2491
  %2535 = vmatprep.subr.bf16.mxu0 0
  %2536 = vmatpush2.bf16.msra.mxu0 %v2490
  %2537 = vmatprep.subr.bf16.mxu0 0
  %2538 = vmatpush2.bf16.msra.mxu0 %v2489
  %2539 = vmatprep.subr.bf16.mxu0 0
  %2540 = vmatpush2.bf16.msra.mxu0 %v2488
  %2541 = vmatprep.subr.bf16.mxu0 0
  %2542 = vmatpush2.bf16.msra.mxu0 %v2487
  %2543 = vmatprep.mubr.bf16.mxu0 %v2345
  %2544 = vmatmul.mubr.bf16.gmra.mxu0 %v2344
  %v2545 = vpop.f32.mrf.mxu0
  %v2546 = vadd.f32 %v2413, %v2545
  %v2547 = vpop.f32.mrf.mxu0
  %v2548 = vpop.f32.mrf.mxu0
  %v2549 = vadd.f32 %v2413, %v2548
  %v2550 = vpop.f32.mrf.mxu0
  %2551 = vmatprep.mubr.bf16.mxu0 %v2347
  %2552 = vmatmul.mubr.bf16.gmra.mxu0 %v2346
  %v2553 = vpop.f32.mrf.mxu0
  %v2554 = vadd.f32 %v2413, %v2553
  %v2555 = vpop.f32.mrf.mxu0
  %v2556 = vpop.f32.mrf.mxu0
  %v2557 = vadd.f32 %v2413, %v2556
  %v2558 = vpop.f32.mrf.mxu0
  %2559 = vmatprep.mubr.bf16.mxu0 %v2349
  %2560 = vmatmul.mubr.bf16.gmra.mxu0 %v2348
  %v2561 = vpop.f32.mrf.mxu0
  %v2562 = vadd.f32 %v2413, %v2561
  %v2563 = vpop.f32.mrf.mxu0
  %v2564 = vpop.f32.mrf.mxu0
  %v2565 = vadd.f32 %v2413, %v2564
  %v2566 = vpop.f32.mrf.mxu0
  %2567 = vmatprep.mubr.bf16.mxu0 %v2351
  %2568 = vmatmul.mubr.bf16.gmra.mxu0 %v2350
  %v2569 = vpop.f32.mrf.mxu0
  %v2570 = vadd.f32 %v2413, %v2569
  %v2571 = vpop.f32.mrf.mxu0
  %v2572 = vpop.f32.mrf.mxu0
  %v2573 = vadd.f32 %v2413, %v2572
  %v2574 = vpop.f32.mrf.mxu0
  %2575 = vmatprep.mubr.bf16.mxu0 %v2353
  %2576 = vmatmul.mubr.bf16.gmra.mxu0 %v2352
  %v2577 = vpop.f32.mrf.mxu0
  %v2578 = vadd.f32 %v2413, %v2577
  %v2579 = vpop.f32.mrf.mxu0
  %v2580 = vpop.f32.mrf.mxu0
  %v2581 = vadd.f32 %v2413, %v2580
  %v2582 = vpop.f32.mrf.mxu0
  %2583 = vmatprep.mubr.bf16.mxu0 %v2355
  %2584 = vmatmul.mubr.bf16.gmra.mxu0 %v2354
  %v2585 = vpop.f32.mrf.mxu0
  %v2586 = vadd.f32 %v2413, %v2585
  %v2587 = vpop.f32.mrf.mxu0
  %v2588 = vpop.f32.mrf.mxu0
  %v2589 = vadd.f32 %v2413, %v2588
  %v2590 = vpop.f32.mrf.mxu0
  %2591 = vmatprep.mubr.bf16.mxu0 %v2357
  %2592 = vmatmul.mubr.bf16.gmra.mxu0 %v2356
  %v2593 = vpop.f32.mrf.mxu0
  %v2594 = vadd.f32 %v2413, %v2593
  %v2595 = vpop.f32.mrf.mxu0
  %v2596 = vpop.f32.mrf.mxu0
  %v2597 = vadd.f32 %v2413, %v2596
  %v2598 = vpop.f32.mrf.mxu0
  %2599 = vmatprep.mubr.bf16.mxu0 %v2359
  %2600 = vmatmul.mubr.bf16.gmra.mxu0 %v2358
  %v2601 = vpop.f32.mrf.mxu0
  %v2602 = vadd.f32 %v2413, %v2601
  %v2603 = vpop.f32.mrf.mxu0
  %v2604 = vpop.f32.mrf.mxu0
  %v2605 = vadd.f32 %v2413, %v2604
  %v2606 = vpop.f32.mrf.mxu0
  %2607 = vmatprep.mubr.bf16.mxu0 %v2361
  %2608 = vmatmul.mubr.bf16.gmra.mxu0 %v2360
  %v2609 = vpop.f32.mrf.mxu0
  %v2610 = vadd.f32 %v2413, %v2609
  %v2611 = vpop.f32.mrf.mxu0
  %v2612 = vpop.f32.mrf.mxu0
  %v2613 = vadd.f32 %v2413, %v2612
  %v2614 = vpop.f32.mrf.mxu0
  %2615 = vmatprep.mubr.bf16.mxu0 %v2363
  %2616 = vmatmul.mubr.bf16.gmra.mxu0 %v2362
  %v2617 = vpop.f32.mrf.mxu0
  %v2618 = vadd.f32 %v2413, %v2617
  %v2619 = vpop.f32.mrf.mxu0
  %v2620 = vpop.f32.mrf.mxu0
  %v2621 = vadd.f32 %v2413, %v2620
  %v2622 = vpop.f32.mrf.mxu0
  %2623 = vmatprep.mubr.bf16.mxu0 %v2365
  %2624 = vmatmul.mubr.bf16.gmra.mxu0 %v2364
  %v2625 = vpop.f32.mrf.mxu0
  %v2626 = vadd.f32 %v2413, %v2625
  %v2627 = vpop.f32.mrf.mxu0
  %v2628 = vpop.f32.mrf.mxu0
  %v2629 = vadd.f32 %v2413, %v2628
  %v2630 = vpop.f32.mrf.mxu0
  %2631 = vmatprep.mubr.bf16.mxu0 %v2367
  %2632 = vmatmul.mubr.bf16.gmra.mxu0 %v2366
  %v2633 = vpop.f32.mrf.mxu0
  %v2634 = vadd.f32 %v2413, %v2633
  %v2635 = vpop.f32.mrf.mxu0
  %v2636 = vpop.f32.mrf.mxu0
  %v2637 = vadd.f32 %v2413, %v2636
  %v2638 = vpop.f32.mrf.mxu0
  %2639 = vmatprep.mubr.bf16.mxu0 %v2369
  %2640 = vmatmul.mubr.bf16.gmra.mxu0 %v2368
  %v2641 = vpop.f32.mrf.mxu0
  %v2642 = vadd.f32 %v2413, %v2641
  %v2643 = vpop.f32.mrf.mxu0
  %v2644 = vpop.f32.mrf.mxu0
  %v2645 = vadd.f32 %v2413, %v2644
  %v2646 = vpop.f32.mrf.mxu0
  %2647 = vmatprep.mubr.bf16.mxu0 %v2371
  %2648 = vmatmul.mubr.bf16.gmra.mxu0 %v2370
  %v2649 = vpop.f32.mrf.mxu0
  %v2650 = vadd.f32 %v2413, %v2649
  %v2651 = vpop.f32.mrf.mxu0
  %v2652 = vpop.f32.mrf.mxu0
  %v2653 = vadd.f32 %v2413, %v2652
  %v2654 = vpop.f32.mrf.mxu0
  %2655 = vmatprep.mubr.bf16.mxu0 %v2373
  %2656 = vmatmul.mubr.bf16.gmra.mxu0 %v2372
  %v2657 = vpop.f32.mrf.mxu0
  %v2658 = vadd.f32 %v2413, %v2657
  %v2659 = vpop.f32.mrf.mxu0
  %v2660 = vpop.f32.mrf.mxu0
  %v2661 = vadd.f32 %v2413, %v2660
  %v2662 = vpop.f32.mrf.mxu0
  %2663 = vmatprep.mubr.bf16.mxu0 %v2375
  %2664 = vmatmul.mubr.bf16.gmra.mxu0 %v2374
  %v2665 = vpop.f32.mrf.mxu0
  %v2666 = vadd.f32 %v2413, %v2665
  %v2667 = vpop.f32.mrf.mxu0
  %v2668 = vpop.f32.mrf.mxu0
  %v2669 = vadd.f32 %v2413, %v2668
  %v2670 = vpop.f32.mrf.mxu0
  %2671 = vdwg.mxu0
  %2672 = vst.msk [vmem:[%s17] sm:$0xff] %vm143, %v2546
  %2673 = vst.msk [vmem:[%s17 + $0x8] sm:$0xff] %vm143, %v2549
  %2674 = vst.msk [vmem:[%s17 + $0x10] sm:$0xff] %vm143, %v2554
  %2675 = vst.msk [vmem:[%s17 + $0x18] sm:$0xff] %vm143, %v2557
  %2676 = vst.msk [vmem:[%s17 + $0x20] sm:$0xff] %vm143, %v2562
  %2677 = vst.msk [vmem:[%s17 + $0x28] sm:$0xff] %vm143, %v2565
  %2678 = vst.msk [vmem:[%s17 + $0x30] sm:$0xff] %vm143, %v2570
  %2679 = vst.msk [vmem:[%s17 + $0x38] sm:$0xff] %vm143, %v2573
  %2680 = vst.msk [vmem:[%s17 + $0x40] sm:$0xff] %vm143, %v2578
  %2681 = vst.msk [vmem:[%s17 + $0x48] sm:$0xff] %vm143, %v2581
  %2682 = vst.msk [vmem:[%s17 + $0x50] sm:$0xff] %vm143, %v2586
  %2683 = vst.msk [vmem:[%s17 + $0x58] sm:$0xff] %vm143, %v2589
  %2684 = vst.msk [vmem:[%s17 + $0x60] sm:$0xff] %vm143, %v2594
  %2685 = vst.msk [vmem:[%s17 + $0x68] sm:$0xff] %vm143, %v2597
  %2686 = vst.msk [vmem:[%s17 + $0x70] sm:$0xff] %vm143, %v2602
  %2687 = vst.msk [vmem:[%s17 + $0x78] sm:$0xff] %vm143, %v2605
  %2688 = vst.msk [vmem:[%s17 + $0x80] sm:$0xff] %vm143, %v2610
  %2689 = vst.msk [vmem:[%s17 + $0x88] sm:$0xff] %vm143, %v2613
  %2690 = vst.msk [vmem:[%s17 + $0x90] sm:$0xff] %vm143, %v2618
  %2691 = vst.msk [vmem:[%s17 + $0x98] sm:$0xff] %vm143, %v2621
  %2692 = vst.msk [vmem:[%s17 + $0xa0] sm:$0xff] %vm143, %v2626
  %2693 = vst.msk [vmem:[%s17 + $0xa8] sm:$0xff] %vm143, %v2629
  %2694 = vst.msk [vmem:[%s17 + $0xb0] sm:$0xff] %vm143, %v2634
  %2695 = vst.msk [vmem:[%s17 + $0xb8] sm:$0xff] %vm143, %v2637
  %2696 = vst.msk [vmem:[%s17 + $0xc0] sm:$0xff] %vm143, %v2642
  %2697 = vst.msk [vmem:[%s17 + $0xc8] sm:$0xff] %vm143, %v2645
  %2698 = vst.msk [vmem:[%s17 + $0xd0] sm:$0xff] %vm143, %v2650
  %2699 = vst.msk [vmem:[%s17 + $0xd8] sm:$0xff] %vm143, %v2653
  %2700 = vst.msk [vmem:[%s17 + $0xe0] sm:$0xff] %vm143, %v2658
  %2701 = vst.msk [vmem:[%s17 + $0xe8] sm:$0xff] %vm143, %v2661
  %2702 = vst.msk [vmem:[%s17 + $0xf0] sm:$0xff] %vm143, %v2666
  %2703 = vst.msk [vmem:[%s17 + $0xf8] sm:$0xff] %vm143, %v2669
  // Predicated region
  $region70: #{tpu_custom_call.1} parent=0 // pred_check
    _
  $region71: #{tpu_custom_call.1} parent=0 // pred_check_branch
    %2705 = sbr.rel (0) target = $region73
  $region72: #{tpu_custom_call.1} parent=0 // pred_region
    _
  $region73: #{tpu_custom_call.1} parent=0 // pred_fallthru
    _
  // Predicated region
  $region74: #{tpu_custom_call.1} parent=0 // pred_check
    _
  $region75: #{tpu_custom_call.1} parent=0 // pred_check_branch
    %2707 = sbr.rel (0) target = $region77
  $region76: #{tpu_custom_call.1} parent=0 // pred_region
    _
  $region77: #{tpu_custom_call.1} parent=0 // pred_fallthru
    _
  // Predicated region
  $region78: #{tpu_custom_call.1} parent=0 // pred_check
    _
  $region79: #{tpu_custom_call.1} parent=0 // pred_check_branch
    %2709 = sbr.rel (0) target = $region81
  $region80: #{tpu_custom_call.1} parent=0 // pred_region
    _
  $region81: #{tpu_custom_call.1} parent=0 // pred_fallthru
    _
  // Predicated region
  $region82: #{tpu_custom_call.1} parent=0 // pred_check
    _
  $region83: #{tpu_custom_call.1} parent=0 // pred_check_branch
    %2711 = sbr.rel (0) target = $region85
  $region84: #{tpu_custom_call.1} parent=0 // pred_region
    _
  $region85: #{tpu_custom_call.1} parent=0 // pred_fallthru
    _

</llo_original>
